<compile_context>
chip_gen: v5e
topology: v5e:2x2
jax: 0.10.0
libtpu: 0.0.40
codegen_flags: <defaults>
</compile_context>

<pallas_src>
import functools

import jax
import jax.numpy as jnp
from jax import lax
from jax.experimental import pallas as pl
from jax.experimental.pallas import tpu as pltpu

EMBED = 768
H1, H2, H3 = 384, 128, 32


# --------------------------------- kernels ------------------------------------
def _mlp_kernel(x_ref, w1_ref, b1_ref, w2_ref, b2_ref, w3_ref, b3_ref,
                part_ref, *, n_tokens, tile_m, has_padding):
    """Per token tile: relu(x@W1'+b1') -> relu(@W2+b2) -> relu(@W3+b3) -> row-sum."""
    i = pl.program_id(0)

    xb = x_ref[...]
    if xb.dtype != jnp.bfloat16:          # no-op when the producer already emits bf16
        xb = xb.astype(jnp.bfloat16)

    # Attention is pre-folded into (W1', b1') on the host (seq_len == 1 => exact).
    h1 = jnp.maximum(
        jnp.dot(xb, w1_ref[...], preferred_element_type=jnp.float32)
        + b1_ref[...], 0.0)                                               # (tm, 384) f32
    h2 = jnp.maximum(
        jnp.dot(h1.astype(jnp.bfloat16), w2_ref[...],
                preferred_element_type=jnp.float32) + b2_ref[...], 0.0)   # (tm, 128)
    h3 = jnp.maximum(
        jnp.dot(h2.astype(jnp.bfloat16), w3_ref[...],
                preferred_element_type=jnp.float32) + b3_ref[...], 0.0)   # (tm, 32)

    if has_padding:
        last = pl.num_programs(0) - 1

        @pl.when(i < last)
        def _():
            part_ref[...] = jnp.sum(h3, axis=0, keepdims=True).reshape(1, 1, H3)

        @pl.when(i == last)
        def _():
            # Only the last tile can contain padded rows; mask them before the sum.
            row = i * tile_m + lax.broadcasted_iota(jnp.int32, h3.shape, 0)
            h3m = jnp.where(row < n_tokens, h3, 0.0)
            part_ref[...] = jnp.sum(h3m, axis=0, keepdims=True).reshape(1, 1, H3)
    else:
        part_ref[...] = jnp.sum(h3, axis=0, keepdims=True).reshape(1, 1, H3)


def _head_kernel(part_ref, w4_ref, b4_ref, out_ref, *, n_tokens):
    """Epilogue: mean over tokens -> fc4 -> sigmoid (single tiny grid step)."""
    mean = jnp.sum(part_ref[...], axis=0) * (1.0 / n_tokens)             # (1, 32) f32
    logit = jnp.sum(mean * w4_ref[...], axis=-1, keepdims=True) + b4_ref[...]  # (1, 1)
    out_ref[...] = 1.0 / (1.0 + jnp.exp(-logit))                         # sigmoid


# --------------------------------- wrapper ------------------------------------
def binary_classifier_forward(x, kparams, *, tile_m=None):
    """x: (n_tokens, 768) in f32 or bf16.  kparams from prepare_kernel_params()."""
    n = x.shape[0]
    if tile_m is None:
        tile_m = 512 if n >= 512 else max(8, ((n + 7) // 8) * 8)
    assert tile_m % 8 == 0
    grid = pl.cdiv(n, tile_m)
    n_pad = grid * tile_m
    if n_pad != n:
        x = jnp.pad(x, ((0, n_pad - n), (0, 0)))

    w1, b1, w2, b2, w3, b3, w4_row, b4 = kparams

    def const(arr):
        # Constant block index -> weight is DMA'd once and stays VMEM-resident.
        return pl.BlockSpec(arr.shape, lambda i: (0, 0))

    partials = pl.pallas_call(
        functools.partial(_mlp_kernel, n_tokens=n, tile_m=tile_m,
                          has_padding=(n_pad != n)),
        out_shape=jax.ShapeDtypeStruct((grid, 1, H3), jnp.float32),
        grid=(grid,),
        in_specs=[
            pl.BlockSpec((tile_m, EMBED), lambda i: (i, 0)),   # streamed token tiles
            const(w1), const(b1),
            const(w2), const(b2),
            const(w3), const(b3),
        ],
        out_specs=pl.BlockSpec((1, 1, H3), lambda i: (i, 0, 0)),
        compiler_params=pltpu.CompilerParams(
            dimension_semantics=("parallel",),   # no cross-tile carry -> both TCs on v7x
            vmem_limit_bytes=32 << 20),
    )(x, w1, b1, w2, b2, w3, b3)

    return pl.pallas_call(
        functools.partial(_head_kernel, n_tokens=n),
        out_shape=jax.ShapeDtypeStruct((1, 1), jnp.float32),
        grid=(1,),
        in_specs=[
            pl.BlockSpec((grid, 1, H3), lambda i: (0, 0, 0)),
            pl.BlockSpec((1, H3), lambda i: (0, 0)),
            pl.BlockSpec((1, 1), lambda i: (0, 0)),
        ],
        out_specs=pl.BlockSpec((1, 1), lambda i: (0, 0)),
    )(partials, w4_row, b4)


# ----------------------------- parameter helpers ------------------------------
def _uniform(key, shape, fan_in):
    bound = 1.0 / (fan_in ** 0.5)
    return jax.random.uniform(key, shape, jnp.float32, -bound, bound)


def make_raw_params(key):
    """f32 master parameters; Linear weights stored pre-transposed as (in, out)."""
    ks = jax.random.split(key, 12)
    wv = _uniform(ks[0], (EMBED, EMBED), EMBED)   # == Wv^T (value projection)
    bv = _uniform(ks[1], (1, EMBED), EMBED)
    wo = _uniform(ks[2], (EMBED, EMBED), EMBED)   # == Wo^T (out projection)
    bo = _uniform(ks[3], (1, EMBED), EMBED)
    w1 = _uniform(ks[4], (EMBED, H1), EMBED)
    b1 = _uniform(ks[5], (1, H1), EMBED)
    w2 = _uniform(ks[6], (H1, H2), H1)
    b2 = _uniform(ks[7], (1, H2), H1)
    w3 = _uniform(ks[8], (H2, H3), H2)
    b3 = _uniform(ks[9], (1, H3), H2)
    w4 = _uniform(ks[10], (H3, 1), H3)
    b4 = _uniform(ks[11], (1, 1), H3)
    return (wv, bv, wo, bo, w1, b1, w2, b2, w3, b3, w4, b4)


def prepare_kernel_params(raw):
    """Fold attention (seq_len == 1) into fc1 entirely in f32, cast bf16 once."""
    wv, bv, wo, bo, w1, b1, w2, b2, w3, b3, w4, b4 = raw
    w1f = (wv @ wo @ w1).astype(jnp.bfloat16)            # (768, 384)
    b1f = (bv @ wo + bo) @ w1 + b1                       # (1, 384) f32
    return (w1f, b1f,
            w2.astype(jnp.bfloat16), b2,
            w3.astype(jnp.bfloat16), b3,
            w4.reshape(1, H3), b4)                       # fc4 row for the epilogue (f32)


def reference_forward(x, raw):
    """Pure-JAX f32 reference matching the PyTorch module (seq axis length 1)."""
    wv, bv, wo, bo, w1, b1, w2, b2, w3, b3, w4, b4 = raw
    attn = (x @ wv + bv) @ wo + bo                 # length-1 softmax == 1.0 exactly
    h1 = jnp.maximum(attn @ w1 + b1, 0.0)
    h2 = jnp.maximum(h1 @ w2 + b2, 0.0)
    h3 = jnp.maximum(h2 @ w3 + b3, 0.0)
    m = jnp.mean(h3, axis=0, keepdims=True)
    return jax.nn.sigmoid(m @ w4 + b4)


# ------------------------------------ demo ------------------------------------
if __name__ == "__main__":
    key = jax.random.PRNGKey(0)
    k_x, k_x2, k_p = jax.random.split(key, 3)

    raw = make_raw_params(k_p)
    kparams = prepare_kernel_params(raw)

    # Multi-tile + ragged-padding path: 40 tokens, forced 16-row tiles (grid=3).
    x = jax.random.normal(k_x, (40, EMBED), jnp.float32)
    out = jax.block_until_ready(binary_classifier_forward(x, kparams, tile_m=16))
    assert out.shape == (1, 1) and out.dtype == jnp.float32
    assert bool(jnp.all(jnp.isfinite(out)))
    ref = reference_forward(x, raw)
    assert bool(jnp.allclose(out, ref, atol=2e-2)), (out, ref)

    # Single-tile auto path (small N).
    x2 = jax.random.normal(k_x2, (8, EMBED), jnp.float32)
    out2 = jax.block_until_ready(binary_classifier_forward(x2, kparams))
    ref2 = reference_forward(x2, raw)
    assert bool(jnp.allclose(out2, ref2, atol=2e-2)), (out2, ref2)

    print("KERNEL_OK")
</pallas_src>

<mosaic_0001>
module attributes {stable_mosaic.version = 11 : i64} {
  func.func @_mlp_kernel(%arg0: i32, %arg1: memref<16x768xf32, #tpu.memory_space<vmem>>, %arg2: memref<768x384xbf16, #tpu.memory_space<vmem>>, %arg3: memref<1x384xf32, #tpu.memory_space<vmem>>, %arg4: memref<384x128xbf16, #tpu.memory_space<vmem>>, %arg5: memref<1x128xf32, #tpu.memory_space<vmem>>, %arg6: memref<128x32xbf16, #tpu.memory_space<vmem>>, %arg7: memref<1x32xf32, #tpu.memory_space<vmem>>, %arg8: memref<1x1x32xf32, #tpu.memory_space<vmem>>) attributes {dimension_semantics = [#tpu.dimension_semantics<parallel>], iteration_bounds = array<i64: 3>, scalar_prefetch = 0 : i64, scratch_operands = 0 : i64, tpu.core_type = #tpu.core_type<tc>, window_params = [{transform_indices = @transform_0, window_bounds = array<i64: 16, 768>}, {pipeline_mode = #tpu.pipeline_mode<synchronous>, transform_indices = @transform_1, window_bounds = array<i64: 768, 384>}, {pipeline_mode = #tpu.pipeline_mode<synchronous>, transform_indices = @transform_2, window_bounds = array<i64: 1, 384>}, {pipeline_mode = #tpu.pipeline_mode<synchronous>, transform_indices = @transform_3, window_bounds = array<i64: 384, 128>}, {pipeline_mode = #tpu.pipeline_mode<synchronous>, transform_indices = @transform_4, window_bounds = array<i64: 1, 128>}, {pipeline_mode = #tpu.pipeline_mode<synchronous>, transform_indices = @transform_5, window_bounds = array<i64: 128, 32>}, {pipeline_mode = #tpu.pipeline_mode<synchronous>, transform_indices = @transform_6, window_bounds = array<i64: 1, 32>}, {transform_indices = @transform_7, window_bounds = array<i64: 1, 1, 32>}]} {
    %c0 = arith.constant 0 : index
    %c0_0 = arith.constant 0 : index
    %0 = vector.load %arg1[%c0, %c0_0] : memref<16x768xf32, #tpu.memory_space<vmem>>, vector<16x768xf32>
    %1 = arith.truncf %0 : vector<16x768xf32> to vector<16x768xbf16>
    %c0_1 = arith.constant 0 : index
    %c0_2 = arith.constant 0 : index
    %2 = vector.load %arg2[%c0_1, %c0_2] : memref<768x384xbf16, #tpu.memory_space<vmem>>, vector<768x384xbf16>
    %cst = arith.constant dense<0.000000e+00> : vector<16x384xf32>
    %3 = tpu.matmul %1, %2, %cst {dimension_numbers = #tpu.dot_dimension_numbers<[1], [0], [0], [1], [0, 0, 1, 1], [], []>} : vector<16x768xbf16>, vector<768x384xbf16>, vector<16x384xf32> -> vector<16x384xf32>
    %c0_3 = arith.constant 0 : index
    %c0_4 = arith.constant 0 : index
    %4 = vector.load %arg3[%c0_3, %c0_4] : memref<1x384xf32, #tpu.memory_space<vmem>>, vector<1x384xf32>
    %5 = vector.broadcast %4 : vector<1x384xf32> to vector<16x384xf32>
    %6 = arith.addf %3, %5 : vector<16x384xf32>
    %cst_5 = arith.constant 0.000000e+00 : f32
    %7 = vector.broadcast %cst_5 : f32 to vector<16x384xf32>
    %8 = arith.maximumf %6, %7 : vector<16x384xf32>
    %9 = arith.truncf %8 : vector<16x384xf32> to vector<16x384xbf16>
    %c0_6 = arith.constant 0 : index
    %c0_7 = arith.constant 0 : index
    %10 = vector.load %arg4[%c0_6, %c0_7] : memref<384x128xbf16, #tpu.memory_space<vmem>>, vector<384x128xbf16>
    %cst_8 = arith.constant dense<0.000000e+00> : vector<16x128xf32>
    %11 = tpu.matmul %9, %10, %cst_8 {dimension_numbers = #tpu.dot_dimension_numbers<[1], [0], [0], [1], [0, 0, 1, 1], [], []>} : vector<16x384xbf16>, vector<384x128xbf16>, vector<16x128xf32> -> vector<16x128xf32>
    %c0_9 = arith.constant 0 : index
    %c0_10 = arith.constant 0 : index
    %12 = vector.load %arg5[%c0_9, %c0_10] : memref<1x128xf32, #tpu.memory_space<vmem>>, vector<1x128xf32>
    %13 = vector.broadcast %12 : vector<1x128xf32> to vector<16x128xf32>
    %14 = arith.addf %11, %13 : vector<16x128xf32>
    %cst_11 = arith.constant 0.000000e+00 : f32
    %15 = vector.broadcast %cst_11 : f32 to vector<16x128xf32>
    %16 = arith.maximumf %14, %15 : vector<16x128xf32>
    %17 = arith.truncf %16 : vector<16x128xf32> to vector<16x128xbf16>
    %c0_12 = arith.constant 0 : index
    %c0_13 = arith.constant 0 : index
    %18 = vector.load %arg6[%c0_12, %c0_13] : memref<128x32xbf16, #tpu.memory_space<vmem>>, vector<128x32xbf16>
    %cst_14 = arith.constant dense<0.000000e+00> : vector<16x32xf32>
    %19 = tpu.matmul %17, %18, %cst_14 {dimension_numbers = #tpu.dot_dimension_numbers<[1], [0], [0], [1], [0, 0, 1, 1], [], []>} : vector<16x128xbf16>, vector<128x32xbf16>, vector<16x32xf32> -> vector<16x32xf32>
    %c0_15 = arith.constant 0 : index
    %c0_16 = arith.constant 0 : index
    %20 = vector.load %arg7[%c0_15, %c0_16] : memref<1x32xf32, #tpu.memory_space<vmem>>, vector<1x32xf32>
    %21 = vector.broadcast %20 : vector<1x32xf32> to vector<16x32xf32>
    %22 = arith.addf %19, %21 : vector<16x32xf32>
    %cst_17 = arith.constant 0.000000e+00 : f32
    %23 = vector.broadcast %cst_17 : f32 to vector<16x32xf32>
    %24 = arith.maximumf %22, %23 : vector<16x32xf32>
    %c2_i32 = arith.constant 2 : i32
    %25 = arith.cmpi slt, %arg0, %c2_i32 : i32
    %26 = arith.extui %25 : i1 to i32
    %c0_i32 = arith.constant 0 : i32
    %27 = arith.cmpi ne, %26, %c0_i32 : i32
    scf.if %27 {
      %cst_20 = arith.constant dense<0.000000e+00> : vector<32xf32>
      %31 = vector.multi_reduction <add>, %24, %cst_20 [0] : vector<16x32xf32> to vector<32xf32>
      %32 = vector.shape_cast %31 : vector<32xf32> to vector<1x32xf32>
      %33 = vector.shape_cast %32 : vector<1x32xf32> to vector<1x1x32xf32>
      %c0_21 = arith.constant 0 : index
      %c0_22 = arith.constant 0 : index
      %c0_23 = arith.constant 0 : index
      %34 = vector.load %arg8[%c0_21, %c0_22, %c0_23] : memref<1x1x32xf32, #tpu.memory_space<vmem>>, vector<1x1x32xf32>
      tpu.vector_store %arg8[%c0_21, %c0_22, %c0_23], %33 {strides = array<i32>} : memref<1x1x32xf32, #tpu.memory_space<vmem>>, vector<1x1x32xf32>,
    } else {
    }
    %c2_i32_18 = arith.constant 2 : i32
    %28 = arith.cmpi eq, %arg0, %c2_i32_18 : i32
    %29 = arith.extui %28 : i1 to i32
    %c0_i32_19 = arith.constant 0 : i32
    %30 = arith.cmpi ne, %29, %c0_i32_19 : i32
    scf.if %30 {
      %c16_i32 = arith.constant 16 : i32
      %31 = arith.muli %arg0, %c16_i32 : i32
      %32 = tpu.iota {dimensions = array<i32: 0>} : vector<16x32xi32>
      %33 = vector.broadcast %31 : i32 to vector<16x32xi32>
      %34 = arith.addi %33, %32 : vector<16x32xi32>
      %c40_i32 = arith.constant 40 : i32
      %35 = vector.broadcast %c40_i32 : i32 to vector<16x32xi32>
      %36 = arith.cmpi slt, %34, %35 : vector<16x32xi32>
      %cst_20 = arith.constant 0.000000e+00 : f32
      %37 = vector.broadcast %cst_20 : f32 to vector<16x32xf32>
      %38 = arith.select %36, %24, %37 : vector<16x32xi1>, vector<16x32xf32>
      %cst_21 = arith.constant dense<0.000000e+00> : vector<32xf32>
      %39 = vector.multi_reduction <add>, %38, %cst_21 [0] : vector<16x32xf32> to vector<32xf32>
      %40 = vector.shape_cast %39 : vector<32xf32> to vector<1x32xf32>
      %41 = vector.shape_cast %40 : vector<1x32xf32> to vector<1x1x32xf32>
      %c0_22 = arith.constant 0 : index
      %c0_23 = arith.constant 0 : index
      %c0_24 = arith.constant 0 : index
      %42 = vector.load %arg8[%c0_22, %c0_23, %c0_24] : memref<1x1x32xf32, #tpu.memory_space<vmem>>, vector<1x1x32xf32>
      tpu.vector_store %arg8[%c0_22, %c0_23, %c0_24], %41 {strides = array<i32>} : memref<1x1x32xf32, #tpu.memory_space<vmem>>, vector<1x1x32xf32>,
    } else {
    }
    return
  }
  func.func @transform_0(%arg0: i32) -> (i32, i32) {
    %c0_i32 = arith.constant 0 : i32
    %c0_i32_0 = arith.constant 0 : i32
    return %arg0, %c0_i32 : i32, i32
  }
  func.func @transform_1(%arg0: i32) -> (i32, i32) {
    %c0_i32 = arith.constant 0 : i32
    %c0_i32_0 = arith.constant 0 : i32
    %c0_i32_1 = arith.constant 0 : i32
    return %c0_i32, %c0_i32_0 : i32, i32
  }
  func.func @transform_2(%arg0: i32) -> (i32, i32) {
    %c0_i32 = arith.constant 0 : i32
    %c0_i32_0 = arith.constant 0 : i32
    %c0_i32_1 = arith.constant 0 : i32
    return %c0_i32, %c0_i32_0 : i32, i32
  }
  func.func @transform_3(%arg0: i32) -> (i32, i32) {
    %c0_i32 = arith.constant 0 : i32
    %c0_i32_0 = arith.constant 0 : i32
    %c0_i32_1 = arith.constant 0 : i32
    return %c0_i32, %c0_i32_0 : i32, i32
  }
  func.func @transform_4(%arg0: i32) -> (i32, i32) {
    %c0_i32 = arith.constant 0 : i32
    %c0_i32_0 = arith.constant 0 : i32
    %c0_i32_1 = arith.constant 0 : i32
    return %c0_i32, %c0_i32_0 : i32, i32
  }
  func.func @transform_5(%arg0: i32) -> (i32, i32) {
    %c0_i32 = arith.constant 0 : i32
    %c0_i32_0 = arith.constant 0 : i32
    %c0_i32_1 = arith.constant 0 : i32
    return %c0_i32, %c0_i32_0 : i32, i32
  }
  func.func @transform_6(%arg0: i32) -> (i32, i32) {
    %c0_i32 = arith.constant 0 : i32
    %c0_i32_0 = arith.constant 0 : i32
    %c0_i32_1 = arith.constant 0 : i32
    return %c0_i32, %c0_i32_0 : i32, i32
  }
  func.func @transform_7(%arg0: i32) -> (i32, i32, i32) {
    %c0_i32 = arith.constant 0 : i32
    %c0_i32_0 = arith.constant 0 : i32
    %c0_i32_1 = arith.constant 0 : i32
    return %arg0, %c0_i32, %c0_i32_0 : i32, i32, i32
  }
}

</mosaic_0001>

<llo_original>
// kernel: tpu_custom_call.1
$region0: #{tpu_custom_call.1}
  #allocation0 [shape = 'u32[]', space=smem, size = 0x4, offset = 0x4, fixed_abs, tag = 'smem constant byte address 0x4 - core index']
  #allocation1 [shape = 'u32[72,128]{1,0:T(1,128)}', space=vmem, size = 0x9000, scoped, tag = 'internal scratch']
  %s0 = inlined_call_operand.hbm [shape: f32[48,768], index: 0, kind: input, shape index: {}]
  %s1 = inlined_call_operand.hbm [shape: bf16[768,384], index: 1, kind: input, shape index: {}]
  %s2 = inlined_call_operand.vmem [shape: f32[1,384], index: 2, kind: input, shape index: {}]
  %s3 = inlined_call_operand.hbm [shape: bf16[384,128], index: 3, kind: input, shape index: {}]
  %s4 = inlined_call_operand.vmem [shape: f32[1,128], index: 4, kind: input, shape index: {}]
  %s5 = inlined_call_operand.vmem [shape: bf16[128,32], index: 5, kind: input, shape index: {}]
  %s6 = inlined_call_operand.vmem [shape: f32[1,32], index: 6, kind: input, shape index: {}]
  %s7 = inlined_call_operand.hbm [shape: f32[3,1,32], index: 7, kind: output, shape index: {}]
  %s8 = sld [smem:[#allocation0]]
  $region81: #{tpu_custom_call.1} parent=0
    _
  %s10 = ssub.s32 1, %s8
  %s11 = scalar_select 0, %s10, %s8
  $region1: #{tpu_custom_call.1} parent=0
    #allocation2 [shape = 'u8[98304]{0}', space=vmem, size = 0x18000, scoped, tag = 'input window, operand 0']
    #allocation3 [shape = 's32[2]{0}', space=sflag, size = 0x8, scoped, tag = 'scoped memory for tpu_custom_call.1']
    #allocation4 [shape = 's32[2]{0}', space=sflag, size = 0x8, scoped, tag = 'scoped memory for tpu_custom_call.1']
    #allocation5 [shape = 'u8[589824]{0}', space=vmem, size = 0x90000, scoped, tag = 'input window, operand 1, single buffered']
    #allocation6 [shape = 's32[1]{0}', space=sflag, size = 0x4, scoped, tag = 'scoped memory for tpu_custom_call.1']
    #allocation7 [shape = 'u8[98304]{0}', space=vmem, size = 0x18000, scoped, tag = 'input window, operand 3, single buffered']
    #allocation8 [shape = 'u8[1024]{0}', space=vmem, size = 0x400, scoped, tag = 'output window, operand 0']
    %12 = vsyncpa [#allocation3], 0
    %s13 = scalar_lea.sflag [#allocation3], 1
    %14 = vsyncpa %s13, 0
    %15 = vsyncpa [#allocation6], 0
    %16 = vsyncpa [#allocation4], 0
    %s17 = scalar_lea.sflag [#allocation4], 1
    %18 = vsyncpa %s17, 0
    loop: start=0, step=1, limit=5
    $region2: #{tpu_custom_call.1} parent=1 // loop_pre_header
      _
    $region3: #{tpu_custom_call.1} parent=1 // loop_header
      %s20 = sphi 0, %s24
      %p21 = scmp.ge.s32.totalorder %s20, 5
      %s30 = sphi 0, %s32
      %s33 = sphi 0, %s30
      %s34 = sphi 0, %s33
      %s50 = sphi 0, %s34
      %s54 = sphi 0, %s54
      %s56 = sphi 0, %s54
      %s57 = sphi 0, %s56
      %s71 = sphi 0, %s57
      %s75 = sphi 0, %s75
      %s77 = sphi 0, %s75
      %s78 = sphi 0, %s77
      %s92 = sphi 0, %s78
      %s96 = sphi 0, %s96
      %s98 = sphi 0, %s96
      %s99 = sphi 0, %s98
      %s113 = sphi 0, %s99
      %s117 = sphi 0, %s117
      %s119 = sphi 0, %s117
      %s120 = sphi 0, %s119
      %s134 = sphi 0, %s120
      %s138 = sphi 0, %s138
      %s140 = sphi 0, %s138
      %s141 = sphi 0, %s140
      %s155 = sphi 0, %s141
      %s159 = sphi 0, %s159
      %s161 = sphi 0, %s159
      %s162 = sphi 0, %s161
      %s176 = sphi 0, %s162
      %s182 = sphi 0, %s184
      %s185 = sphi 0, %s182
      %s186 = sphi 0, %s185
      %s202 = sphi 0, %s186
    $region4: #{tpu_custom_call.1} parent=1 // loop_header_branch
      %23 = sbr.rel (%p21) target = $region8
    $region5: #{tpu_custom_call.1} parent=1 // loop_body
      %s25 = ssub.s32 %s20, 1
      %s26 = ssub.s32 %s20, 2
      %s27 = sadd.s32 %s20, 1
      %s28 = ssub.s32 %s20, %s27
      %p29 = scmp.eq.s32.totalorder %s28, 0
      %s31 = sadd.s32 %s30, 1
      %s32 = scalar_select %p29, %s30, %s31
      %p35 = pneg %p29
      %p36 = scmp.eq.s32.totalorder %s20, 2
      %p37 = por %p35, %p36
      %p38 = scmp.ne.s32.totalorder %s30, %s33
      %p39 = scmp.eq.s32.totalorder %s20, 0
      %p40 = por %p38, %p39
      %p41 = scmp.ne.s32.totalorder %s30, %s33
      %p42 = scmp.eq.s32.totalorder %s25, 2
      %p43 = por %p41, %p42
      %p44 = scmp.ne.s32.totalorder %s33, %s34
      %p45 = scmp.eq.s32.totalorder %s25, 0
      %p46 = por %p44, %p45
      %p47 = scmp.ne.s32.totalorder %s33, %s34
      %p48 = scmp.eq.s32.totalorder %s26, 2
      %p49 = por %p47, %p48
      %p51 = scmp.ne.s32.totalorder %s34, %s50
      %p52 = scmp.eq.s32.totalorder %s26, 0
      %p53 = por %p51, %p52
      %s55 = sadd.s32 %s54, 1
      %p58 = scmp.eq.s32.totalorder %s20, 2
      %p59 = scmp.ne.s32.totalorder %s54, %s56
      %p60 = scmp.eq.s32.totalorder %s20, 0
      %p61 = por %p59, %p60
      %p62 = scmp.ne.s32.totalorder %s54, %s56
      %p63 = scmp.eq.s32.totalorder %s25, 2
      %p64 = por %p62, %p63
      %p65 = scmp.ne.s32.totalorder %s56, %s57
      %p66 = scmp.eq.s32.totalorder %s25, 0
      %p67 = por %p65, %p66
      %p68 = scmp.ne.s32.totalorder %s56, %s57
      %p69 = scmp.eq.s32.totalorder %s26, 2
      %p70 = por %p68, %p69
      %p72 = scmp.ne.s32.totalorder %s57, %s71
      %p73 = scmp.eq.s32.totalorder %s26, 0
      %p74 = por %p72, %p73
      %s76 = sadd.s32 %s75, 1
      %p79 = scmp.eq.s32.totalorder %s20, 2
      %p80 = scmp.ne.s32.totalorder %s75, %s77
      %p81 = scmp.eq.s32.totalorder %s20, 0
      %p82 = por %p80, %p81
      %p83 = scmp.ne.s32.totalorder %s75, %s77
      %p84 = scmp.eq.s32.totalorder %s25, 2
      %p85 = por %p83, %p84
      %p86 = scmp.ne.s32.totalorder %s77, %s78
      %p87 = scmp.eq.s32.totalorder %s25, 0
      %p88 = por %p86, %p87
      %p89 = scmp.ne.s32.totalorder %s77, %s78
      %p90 = scmp.eq.s32.totalorder %s26, 2
      %p91 = por %p89, %p90
      %p93 = scmp.ne.s32.totalorder %s78, %s92
      %p94 = scmp.eq.s32.totalorder %s26, 0
      %p95 = por %p93, %p94
      %s97 = sadd.s32 %s96, 1
      %p100 = scmp.eq.s32.totalorder %s20, 2
      %p101 = scmp.ne.s32.totalorder %s96, %s98
      %p102 = scmp.eq.s32.totalorder %s20, 0
      %p103 = por %p101, %p102
      %p104 = scmp.ne.s32.totalorder %s96, %s98
      %p105 = scmp.eq.s32.totalorder %s25, 2
      %p106 = por %p104, %p105
      %p107 = scmp.ne.s32.totalorder %s98, %s99
      %p108 = scmp.eq.s32.totalorder %s25, 0
      %p109 = por %p107, %p108
      %p110 = scmp.ne.s32.totalorder %s98, %s99
      %p111 = scmp.eq.s32.totalorder %s26, 2
      %p112 = por %p110, %p111
      %p114 = scmp.ne.s32.totalorder %s99, %s113
      %p115 = scmp.eq.s32.totalorder %s26, 0
      %p116 = por %p114, %p115
      %s118 = sadd.s32 %s117, 1
      %p121 = scmp.eq.s32.totalorder %s20, 2
      %p122 = scmp.ne.s32.totalorder %s117, %s119
      %p123 = scmp.eq.s32.totalorder %s20, 0
      %p124 = por %p122, %p123
      %p125 = scmp.ne.s32.totalorder %s117, %s119
      %p126 = scmp.eq.s32.totalorder %s25, 2
      %p127 = por %p125, %p126
      %p128 = scmp.ne.s32.totalorder %s119, %s120
      %p129 = scmp.eq.s32.totalorder %s25, 0
      %p130 = por %p128, %p129
      %p131 = scmp.ne.s32.totalorder %s119, %s120
      %p132 = scmp.eq.s32.totalorder %s26, 2
      %p133 = por %p131, %p132
      %p135 = scmp.ne.s32.totalorder %s120, %s134
      %p136 = scmp.eq.s32.totalorder %s26, 0
      %p137 = por %p135, %p136
      %s139 = sadd.s32 %s138, 1
      %p142 = scmp.eq.s32.totalorder %s20, 2
      %p143 = scmp.ne.s32.totalorder %s138, %s140
      %p144 = scmp.eq.s32.totalorder %s20, 0
      %p145 = por %p143, %p144
      %p146 = scmp.ne.s32.totalorder %s138, %s140
      %p147 = scmp.eq.s32.totalorder %s25, 2
      %p148 = por %p146, %p147
      %p149 = scmp.ne.s32.totalorder %s140, %s141
      %p150 = scmp.eq.s32.totalorder %s25, 0
      %p151 = por %p149, %p150
      %p152 = scmp.ne.s32.totalorder %s140, %s141
      %p153 = scmp.eq.s32.totalorder %s26, 2
      %p154 = por %p152, %p153
      %p156 = scmp.ne.s32.totalorder %s141, %s155
      %p157 = scmp.eq.s32.totalorder %s26, 0
      %p158 = por %p156, %p157
      %s160 = sadd.s32 %s159, 1
      %p163 = scmp.eq.s32.totalorder %s20, 2
      %p164 = scmp.ne.s32.totalorder %s159, %s161
      %p165 = scmp.eq.s32.totalorder %s20, 0
      %p166 = por %p164, %p165
      %p167 = scmp.ne.s32.totalorder %s159, %s161
      %p168 = scmp.eq.s32.totalorder %s25, 2
      %p169 = por %p167, %p168
      %p170 = scmp.ne.s32.totalorder %s161, %s162
      %p171 = scmp.eq.s32.totalorder %s25, 0
      %p172 = por %p170, %p171
      %p173 = scmp.ne.s32.totalorder %s161, %s162
      %p174 = scmp.eq.s32.totalorder %s26, 2
      %p175 = por %p173, %p174
      %p177 = scmp.ne.s32.totalorder %s162, %s176
      %p178 = scmp.eq.s32.totalorder %s26, 0
      %p179 = por %p177, %p178
      %s180 = ssub.s32 %s20, %s27
      %p181 = scmp.eq.s32.totalorder %s180, 0
      %s183 = sadd.s32 %s182, 1
      %s184 = scalar_select %p181, %s182, %s183
      %p187 = pneg %p181
      %p188 = scmp.eq.s32.totalorder %s20, 2
      %p189 = por %p187, %p188
      %p190 = scmp.ne.s32.totalorder %s182, %s185
      %p191 = scmp.eq.s32.totalorder %s20, 0
      %p192 = por %p190, %p191
      %p193 = scmp.ne.s32.totalorder %s182, %s185
      %p194 = scmp.eq.s32.totalorder %s25, 2
      %p195 = por %p193, %p194
      %p196 = scmp.ne.s32.totalorder %s185, %s186
      %p197 = scmp.eq.s32.totalorder %s25, 0
      %p198 = por %p196, %p197
      %p199 = scmp.ne.s32.totalorder %s185, %s186
      %p200 = scmp.eq.s32.totalorder %s26, 2
      %p201 = por %p199, %p200
      %p203 = scmp.ne.s32.totalorder %s186, %s202
      %p204 = scmp.eq.s32.totalorder %s26, 0
      %p205 = por %p203, %p204
      %p206 = scmp.le.s32.totalorder 1, %s20
      %p207 = scmp.lt.s32.totalorder %s20, 4
      %p208 = pnand %p206, %p207
      %p209 = pneg %p208
      // Predicated region
      $region9: #{tpu_custom_call.1} parent=5 // pred_check
        _
      $region10: #{tpu_custom_call.1} parent=5 // pred_check_branch
        %211 = sbr.rel (%p208) target = $region12
      $region11: #{tpu_custom_call.1} parent=5 // pred_region
        %s212 = ssub.s32 %s20, 1
        // Predicated region
        $region13: #{tpu_custom_call.1} parent=11 // pred_check
          %p213 = pneg %p67
        $region14: #{tpu_custom_call.1} parent=11 // pred_check_branch
          %215 = sbr.rel (%p213) target = $region16
        $region15: #{tpu_custom_call.1} parent=11 // pred_region
          %217 = vsyncadd [#allocation6], 0
          %s218 = sshll.u32 %s1, 4
          %s219 = int_to_ptr.hbm [resolvable:$true] %s218
          %s220 = sshll.u32 [#allocation5], 4
          %s221 = int_to_ptr.vmem [resolvable:$true] %s220
          %226 = dma.hbm_to_vmem [thread:$0]  %s219, 18432, %s221, [#allocation6], 192, 192, 12
        $region16: #{tpu_custom_call.1} parent=11 // pred_fallthru
          _
        // Predicated region
        $region17: #{tpu_custom_call.1} parent=11 // pred_check
          %p227 = pneg %p88
        $region18: #{tpu_custom_call.1} parent=11 // pred_check_branch
          %229 = sbr.rel (%p227) target = $region20
        $region19: #{tpu_custom_call.1} parent=11 // pred_region
          _
        $region20: #{tpu_custom_call.1} parent=11 // pred_fallthru
          _
        // Predicated region
        $region21: #{tpu_custom_call.1} parent=11 // pred_check
          %p230 = pneg %p109
        $region22: #{tpu_custom_call.1} parent=11 // pred_check_branch
          %232 = sbr.rel (%p230) target = $region24
        $region23: #{tpu_custom_call.1} parent=11 // pred_region
          %234 = vsyncadd [#allocation6], 0
          %s235 = sshll.u32 %s3, 4
          %s236 = int_to_ptr.hbm [resolvable:$true] %s235
          %s237 = sshll.u32 [#allocation7], 4
          %s238 = int_to_ptr.vmem [resolvable:$true] %s237
          %243 = dma.hbm_to_vmem [thread:$0]  %s236, 3072, %s238, [#allocation6], 64, 64, 4
        $region24: #{tpu_custom_call.1} parent=11 // pred_fallthru
          _
        // Predicated region
        $region25: #{tpu_custom_call.1} parent=11 // pred_check
          %p244 = pneg %p130
        $region26: #{tpu_custom_call.1} parent=11 // pred_check_branch
          %246 = sbr.rel (%p244) target = $region28
        $region27: #{tpu_custom_call.1} parent=11 // pred_region
          _
        $region28: #{tpu_custom_call.1} parent=11 // pred_fallthru
          _
        // Predicated region
        $region29: #{tpu_custom_call.1} parent=11 // pred_check
          %p247 = pneg %p151
        $region30: #{tpu_custom_call.1} parent=11 // pred_check_branch
          %249 = sbr.rel (%p247) target = $region32
        $region31: #{tpu_custom_call.1} parent=11 // pred_region
          _
        $region32: #{tpu_custom_call.1} parent=11 // pred_fallthru
          _
        // Predicated region
        $region33: #{tpu_custom_call.1} parent=11 // pred_check
          %p250 = pneg %p172
        $region34: #{tpu_custom_call.1} parent=11 // pred_check_branch
          %252 = sbr.rel (%p250) target = $region36
        $region35: #{tpu_custom_call.1} parent=11 // pred_region
          _
        $region36: #{tpu_custom_call.1} parent=11 // pred_fallthru
          _
      $region12: #{tpu_custom_call.1} parent=5 // pred_fallthru
        _
      %p253 = scmp.lt.s32.totalorder %s20, 3
      // Predicated region
      $region37: #{tpu_custom_call.1} parent=5 // pred_check
        %p254 = pneg %p253
      $region38: #{tpu_custom_call.1} parent=5 // pred_check_branch
        %256 = sbr.rel (%p254) target = $region40
      $region39: #{tpu_custom_call.1} parent=5 // pred_region
        // Predicated region
        $region41: #{tpu_custom_call.1} parent=39 // pred_check
          %p257 = pneg %p40
        $region42: #{tpu_custom_call.1} parent=39 // pred_check_branch
          %259 = sbr.rel (%p257) target = $region44
        $region43: #{tpu_custom_call.1} parent=39 // pred_region
          %s260 = sand.u32 %s30, 1
          %s261 = scalar_lea.sflag [#allocation3], %s260
          %s262 = sand.u32 %s30, 1
          %s263 = smul.addr %s262, 96
          %s264 = scalar_lea.vmem [#allocation2], %s263
          %s265 = smul.u32 2, %s20
          %267 = vsyncadd %s261, 0
          %s268 = smul.addr %s265, 6
          %s269 = smul.addr %s268, 8
          %s270 = scalar_lea.hbm %s0, %s269
          %s271 = sshll.u32 %s270, 4
          %s272 = int_to_ptr.hbm [resolvable:$true] %s271
          %s273 = sshll.u32 %s264, 4
          %s274 = int_to_ptr.vmem [resolvable:$true] %s273
          %279 = dma.hbm_to_vmem [thread:$0]  %s272, 1536, %s274, %s261, 768, 768, 48
        $region44: #{tpu_custom_call.1} parent=39 // pred_fallthru
          _
      $region40: #{tpu_custom_call.1} parent=5 // pred_fallthru
        _
      %p280 = scmp.le.s32.totalorder 1, %s20
      %p281 = scmp.lt.s32.totalorder %s20, 4
      %p282 = pnand %p280, %p281
      %p283 = pneg %p282
      // Predicated region
      $region45: #{tpu_custom_call.1} parent=5 // pred_check
        _
      $region46: #{tpu_custom_call.1} parent=5 // pred_check_branch
        %285 = sbr.rel (%p282) target = $region48
      $region47: #{tpu_custom_call.1} parent=5 // pred_region
        %s286 = ssub.s32 %s20, 1
        %s287 = sand.u32 %s33, 1
        %s288 = scalar_lea.sflag [#allocation3], %s287
        %s289 = sand.u32 %s33, 1
        %s290 = smul.addr %s289, 96
        %s291 = scalar_lea.vmem [#allocation2], %s290
        // Predicated region
        $region49: #{tpu_custom_call.1} parent=47 // pred_check
          %p292 = pneg %p46
        $region50: #{tpu_custom_call.1} parent=47 // pred_check_branch
          %294 = sbr.rel (%p292) target = $region52
        $region51: #{tpu_custom_call.1} parent=47 // pred_region
          %296 = dma.done %s288, 1536
        $region52: #{tpu_custom_call.1} parent=47 // pred_fallthru
          _
        // Predicated region
        $region53: #{tpu_custom_call.1} parent=47 // pred_check
          %p297 = pneg %p67
        $region54: #{tpu_custom_call.1} parent=47 // pred_check_branch
          %299 = sbr.rel (%p297) target = $region56
        $region55: #{tpu_custom_call.1} parent=47 // pred_region
          %301 = dma.done [#allocation6], 18432
        $region56: #{tpu_custom_call.1} parent=47 // pred_fallthru
          _
        // Predicated region
        $region57: #{tpu_custom_call.1} parent=47 // pred_check
          %p302 = pneg %p109
        $region58: #{tpu_custom_call.1} parent=47 // pred_check_branch
          %304 = sbr.rel (%p302) target = $region60
        $region59: #{tpu_custom_call.1} parent=47 // pred_region
          %306 = dma.done [#allocation6], 3072
        $region60: #{tpu_custom_call.1} parent=47 // pred_fallthru
          _
        %s307 = sand.u32 %s33, 1
        %s308 = scalar_lea.sflag [#allocation3], %s307
        %s309 = sand.u32 %s33, 1
        %s310 = smul.addr %s309, 96
        %s311 = scalar_lea.vmem [#allocation2], %s310
        %p312 = pneg %p46
        %p313 = pneg %p43
        %p314 = pneg %p67
        %p315 = pneg %p64
        %p316 = pneg %p88
        %p317 = pneg %p85
        %p318 = pneg %p109
        %p319 = pneg %p106
        %p320 = pneg %p130
        %p321 = pneg %p127
        %p322 = pneg %p151
        %p323 = pneg %p148
        %p324 = pneg %p172
        %p325 = pneg %p169
        %p326 = pneg %p198
        %p327 = pneg %p195
        %s328 = sand.u32 %s185, 1
        %s329 = scalar_lea.sflag [#allocation4], %s328
        %s330 = sand.u32 %s185, 1
        %s331 = scalar_lea.vmem [#allocation8], %s330
        %s332 = smul.u32 2, %s25
        %v333 = vld [vmem:[%s291] sm:$0xff]
        %v334 = vld [vmem:[%s291 + $0x8] sm:$0xff]
        %v335 = vld [vmem:[%s291 + $0x10] sm:$0xff]
        %v336 = vld [vmem:[%s291 + $0x18] sm:$0xff]
        %v337 = vld [vmem:[%s291 + $0x20] sm:$0xff]
        %v338 = vld [vmem:[%s291 + $0x28] sm:$0xff]
        %v339 = vld [vmem:[%s291 + $0x30] sm:$0xff]
        %v340 = vld [vmem:[%s291 + $0x38] sm:$0xff]
        %v341 = vld [vmem:[%s291 + $0x40] sm:$0xff]
        %v342 = vld [vmem:[%s291 + $0x48] sm:$0xff]
        %v343 = vld [vmem:[%s291 + $0x50] sm:$0xff]
        %v344 = vld [vmem:[%s291 + $0x58] sm:$0xff]
        %v345 = vpack.c.bf16 %v339, %v333
        %v346 = vpack.c.bf16 %v340, %v334
        %v347 = vpack.c.bf16 %v341, %v335
        %v348 = vpack.c.bf16 %v342, %v336
        %v349 = vpack.c.bf16 %v343, %v337
        %v350 = vpack.c.bf16 %v344, %v338
        %v351 = vld [vmem:[#allocation5] sm:$0xff]
        %v352 = vld [vmem:[#allocation5 + $0x8] sm:$0xf]
        %v353 = vld [vmem:[#allocation5 + $0xc] sm:$0xff]
        %v354 = vld [vmem:[#allocation5 + $0x14] sm:$0xf]
        %v355 = vld [vmem:[#allocation5 + $0x18] sm:$0xff]
        %v356 = vld [vmem:[#allocation5 + $0x20] sm:$0xf]
        %v357 = vld [vmem:[#allocation5 + $0x24] sm:$0xff]
        %v358 = vld [vmem:[#allocation5 + $0x2c] sm:$0xf]
        %v359 = vld [vmem:[#allocation5 + $0x30] sm:$0xff]
        %v360 = vld [vmem:[#allocation5 + $0x38] sm:$0xf]
        %v361 = vld [vmem:[#allocation5 + $0x3c] sm:$0xff]
        %v362 = vld [vmem:[#allocation5 + $0x44] sm:$0xf]
        %v363 = vld [vmem:[#allocation5 + $0x48] sm:$0xff]
        %v364 = vld [vmem:[#allocation5 + $0x50] sm:$0xf]
        %v365 = vld [vmem:[#allocation5 + $0x54] sm:$0xff]
        %v366 = vld [vmem:[#allocation5 + $0x5c] sm:$0xf]
        %v367 = vld [vmem:[#allocation5 + $0x60] sm:$0xff]
        %v368 = vld [vmem:[#allocation5 + $0x68] sm:$0xf]
        %v369 = vld [vmem:[#allocation5 + $0x6c] sm:$0xff]
        %v370 = vld [vmem:[#allocation5 + $0x74] sm:$0xf]
        %v371 = vld [vmem:[#allocation5 + $0x78] sm:$0xff]
        %v372 = vld [vmem:[#allocation5 + $0x80] sm:$0xf]
        %v373 = vld [vmem:[#allocation5 + $0x84] sm:$0xff]
        %v374 = vld [vmem:[#allocation5 + $0x8c] sm:$0xf]
        %v375 = vld [vmem:[#allocation5 + $0x90] sm:$0xff]
        %v376 = vld [vmem:[#allocation5 + $0x98] sm:$0xf]
        %v377 = vld [vmem:[#allocation5 + $0x9c] sm:$0xff]
        %v378 = vld [vmem:[#allocation5 + $0xa4] sm:$0xf]
        %v379 = vld [vmem:[#allocation5 + $0xa8] sm:$0xff]
        %v380 = vld [vmem:[#allocation5 + $0xb0] sm:$0xf]
        %v381 = vld [vmem:[#allocation5 + $0xb4] sm:$0xff]
        %v382 = vld [vmem:[#allocation5 + $0xbc] sm:$0xf]
        %v383 = vld [vmem:[#allocation5 + $0xc0] sm:$0xff]
        %v384 = vld [vmem:[#allocation5 + $0xc8] sm:$0xf]
        %v385 = vld [vmem:[#allocation5 + $0xcc] sm:$0xff]
        %v386 = vld [vmem:[#allocation5 + $0xd4] sm:$0xf]
        %v387 = vld [vmem:[#allocation5 + $0xd8] sm:$0xff]
        %v388 = vld [vmem:[#allocation5 + $0xe0] sm:$0xf]
        %v389 = vld [vmem:[#allocation5 + $0xe4] sm:$0xff]
        %v390 = vld [vmem:[#allocation5 + $0xec] sm:$0xf]
        %v391 = vld [vmem:[#allocation5 + $0xf0] sm:$0xff]
        %v392 = vld [vmem:[#allocation5 + $0xf8] sm:$0xf]
        %v393 = vld [vmem:[#allocation5 + $0xfc] sm:$0xff]
        %v394 = vld [vmem:[#allocation5 + $0x104] sm:$0xf]
        %v395 = vld [vmem:[#allocation5 + $0x108] sm:$0xff]
        %v396 = vld [vmem:[#allocation5 + $0x110] sm:$0xf]
        %v397 = vld [vmem:[#allocation5 + $0x114] sm:$0xff]
        %v398 = vld [vmem:[#allocation5 + $0x11c] sm:$0xf]
        %v399 = vld [vmem:[#allocation5 + $0x120] sm:$0xff]
        %v400 = vld [vmem:[#allocation5 + $0x128] sm:$0xf]
        %v401 = vld [vmem:[#allocation5 + $0x12c] sm:$0xff]
        %v402 = vld [vmem:[#allocation5 + $0x134] sm:$0xf]
        %v403 = vld [vmem:[#allocation5 + $0x138] sm:$0xff]
        %v404 = vld [vmem:[#allocation5 + $0x140] sm:$0xf]
        %v405 = vld [vmem:[#allocation5 + $0x144] sm:$0xff]
        %v406 = vld [vmem:[#allocation5 + $0x14c] sm:$0xf]
        %v407 = vld [vmem:[#allocation5 + $0x150] sm:$0xff]
        %v408 = vld [vmem:[#allocation5 + $0x158] sm:$0xf]
        %v409 = vld [vmem:[#allocation5 + $0x15c] sm:$0xff]
        %v410 = vld [vmem:[#allocation5 + $0x164] sm:$0xf]
        %v411 = vld [vmem:[#allocation5 + $0x168] sm:$0xff]
        %v412 = vld [vmem:[#allocation5 + $0x170] sm:$0xf]
        %v413 = vld [vmem:[#allocation5 + $0x174] sm:$0xff]
        %v414 = vld [vmem:[#allocation5 + $0x17c] sm:$0xf]
        %v415 = vld [vmem:[#allocation5 + $0x180] sm:$0xff]
        %v416 = vld [vmem:[#allocation5 + $0x188] sm:$0xf]
        %v417 = vld [vmem:[#allocation5 + $0x18c] sm:$0xff]
        %v418 = vld [vmem:[#allocation5 + $0x194] sm:$0xf]
        %v419 = vld [vmem:[#allocation5 + $0x198] sm:$0xff]
        %v420 = vld [vmem:[#allocation5 + $0x1a0] sm:$0xf]
        %v421 = vld [vmem:[#allocation5 + $0x1a4] sm:$0xff]
        %v422 = vld [vmem:[#allocation5 + $0x1ac] sm:$0xf]
        %v423 = vld [vmem:[#allocation5 + $0x1b0] sm:$0xff]
        %v424 = vld [vmem:[#allocation5 + $0x1b8] sm:$0xf]
        %v425 = vld [vmem:[#allocation5 + $0x1bc] sm:$0xff]
        %v426 = vld [vmem:[#allocation5 + $0x1c4] sm:$0xf]
        %v427 = vld [vmem:[#allocation5 + $0x1c8] sm:$0xff]
        %v428 = vld [vmem:[#allocation5 + $0x1d0] sm:$0xf]
        %v429 = vld [vmem:[#allocation5 + $0x1d4] sm:$0xff]
        %v430 = vld [vmem:[#allocation5 + $0x1dc] sm:$0xf]
        %v431 = vld [vmem:[#allocation5 + $0x1e0] sm:$0xff]
        %v432 = vld [vmem:[#allocation5 + $0x1e8] sm:$0xf]
        %v433 = vld [vmem:[#allocation5 + $0x1ec] sm:$0xff]
        %v434 = vld [vmem:[#allocation5 + $0x1f4] sm:$0xf]
        %v435 = vld [vmem:[#allocation5 + $0x1f8] sm:$0xff]
        %v436 = vld [vmem:[#allocation5 + $0x200] sm:$0xf]
        %v437 = vld [vmem:[#allocation5 + $0x204] sm:$0xff]
        %v438 = vld [vmem:[#allocation5 + $0x20c] sm:$0xf]
        %v439 = vld [vmem:[#allocation5 + $0x210] sm:$0xff]
        %v440 = vld [vmem:[#allocation5 + $0x218] sm:$0xf]
        %v441 = vld [vmem:[#allocation5 + $0x21c] sm:$0xff]
        %v442 = vld [vmem:[#allocation5 + $0x224] sm:$0xf]
        %v443 = vld [vmem:[#allocation5 + $0x228] sm:$0xff]
        %v444 = vld [vmem:[#allocation5 + $0x230] sm:$0xf]
        %v445 = vld [vmem:[#allocation5 + $0x234] sm:$0xff]
        %v446 = vld [vmem:[#allocation5 + $0x23c] sm:$0xf]
        %v447 = vld [vmem:[#allocation5 + $0x240] sm:$0xff]
        %v448 = vld [vmem:[#allocation5 + $0x248] sm:$0xf]
        %v449 = vld [vmem:[#allocation5 + $0x24c] sm:$0xff]
        %v450 = vld [vmem:[#allocation5 + $0x254] sm:$0xf]
        %v451 = vld [vmem:[#allocation5 + $0x258] sm:$0xff]
        %v452 = vld [vmem:[#allocation5 + $0x260] sm:$0xf]
        %v453 = vld [vmem:[#allocation5 + $0x264] sm:$0xff]
        %v454 = vld [vmem:[#allocation5 + $0x26c] sm:$0xf]
        %v455 = vld [vmem:[#allocation5 + $0x270] sm:$0xff]
        %v456 = vld [vmem:[#allocation5 + $0x278] sm:$0xf]
        %v457 = vld [vmem:[#allocation5 + $0x27c] sm:$0xff]
        %v458 = vld [vmem:[#allocation5 + $0x284] sm:$0xf]
        %v459 = vld [vmem:[#allocation5 + $0x288] sm:$0xff]
        %v460 = vld [vmem:[#allocation5 + $0x290] sm:$0xf]
        %v461 = vld [vmem:[#allocation5 + $0x294] sm:$0xff]
        %v462 = vld [vmem:[#allocation5 + $0x29c] sm:$0xf]
        %v463 = vld [vmem:[#allocation5 + $0x2a0] sm:$0xff]
        %v464 = vld [vmem:[#allocation5 + $0x2a8] sm:$0xf]
        %v465 = vld [vmem:[#allocation5 + $0x2ac] sm:$0xff]
        %v466 = vld [vmem:[#allocation5 + $0x2b4] sm:$0xf]
        %v467 = vld [vmem:[#allocation5 + $0x2b8] sm:$0xff]
        %v468 = vld [vmem:[#allocation5 + $0x2c0] sm:$0xf]
        %v469 = vld [vmem:[#allocation5 + $0x2c4] sm:$0xff]
        %v470 = vld [vmem:[#allocation5 + $0x2cc] sm:$0xf]
        %v471 = vld [vmem:[#allocation5 + $0x2d0] sm:$0xff]
        %v472 = vld [vmem:[#allocation5 + $0x2d8] sm:$0xf]
        %v473 = vld [vmem:[#allocation5 + $0x2dc] sm:$0xff]
        %v474 = vld [vmem:[#allocation5 + $0x2e4] sm:$0xf]
        %v475 = vld [vmem:[#allocation5 + $0x2e8] sm:$0xff]
        %v476 = vld [vmem:[#allocation5 + $0x2f0] sm:$0xf]
        %v477 = vld [vmem:[#allocation5 + $0x2f4] sm:$0xff]
        %v478 = vld [vmem:[#allocation5 + $0x2fc] sm:$0xf]
        %v479 = vld [vmem:[#allocation5 + $0x300] sm:$0xff]
        %v480 = vld [vmem:[#allocation5 + $0x308] sm:$0xf]
        %v481 = vld [vmem:[#allocation5 + $0x30c] sm:$0xff]
        %v482 = vld [vmem:[#allocation5 + $0x314] sm:$0xf]
        %v483 = vld [vmem:[#allocation5 + $0x318] sm:$0xff]
        %v484 = vld [vmem:[#allocation5 + $0x320] sm:$0xf]
        %v485 = vld [vmem:[#allocation5 + $0x324] sm:$0xff]
        %v486 = vld [vmem:[#allocation5 + $0x32c] sm:$0xf]
        %v487 = vld [vmem:[#allocation5 + $0x330] sm:$0xff]
        %v488 = vld [vmem:[#allocation5 + $0x338] sm:$0xf]
        %v489 = vld [vmem:[#allocation5 + $0x33c] sm:$0xff]
        %v490 = vld [vmem:[#allocation5 + $0x344] sm:$0xf]
        %v491 = vld [vmem:[#allocation5 + $0x348] sm:$0xff]
        %v492 = vld [vmem:[#allocation5 + $0x350] sm:$0xf]
        %v493 = vld [vmem:[#allocation5 + $0x354] sm:$0xff]
        %v494 = vld [vmem:[#allocation5 + $0x35c] sm:$0xf]
        %v495 = vld [vmem:[#allocation5 + $0x360] sm:$0xff]
        %v496 = vld [vmem:[#allocation5 + $0x368] sm:$0xf]
        %v497 = vld [vmem:[#allocation5 + $0x36c] sm:$0xff]
        %v498 = vld [vmem:[#allocation5 + $0x374] sm:$0xf]
        %v499 = vld [vmem:[#allocation5 + $0x378] sm:$0xff]
        %v500 = vld [vmem:[#allocation5 + $0x380] sm:$0xf]
        %v501 = vld [vmem:[#allocation5 + $0x384] sm:$0xff]
        %v502 = vld [vmem:[#allocation5 + $0x38c] sm:$0xf]
        %v503 = vld [vmem:[#allocation5 + $0x390] sm:$0xff]
        %v504 = vld [vmem:[#allocation5 + $0x398] sm:$0xf]
        %v505 = vld [vmem:[#allocation5 + $0x39c] sm:$0xff]
        %v506 = vld [vmem:[#allocation5 + $0x3a4] sm:$0xf]
        %v507 = vld [vmem:[#allocation5 + $0x3a8] sm:$0xff]
        %v508 = vld [vmem:[#allocation5 + $0x3b0] sm:$0xf]
        %v509 = vld [vmem:[#allocation5 + $0x3b4] sm:$0xff]
        %v510 = vld [vmem:[#allocation5 + $0x3bc] sm:$0xf]
        %v511 = vld [vmem:[#allocation5 + $0x3c0] sm:$0xff]
        %v512 = vld [vmem:[#allocation5 + $0x3c8] sm:$0xf]
        %v513 = vld [vmem:[#allocation5 + $0x3cc] sm:$0xff]
        %v514 = vld [vmem:[#allocation5 + $0x3d4] sm:$0xf]
        %v515 = vld [vmem:[#allocation5 + $0x3d8] sm:$0xff]
        %v516 = vld [vmem:[#allocation5 + $0x3e0] sm:$0xf]
        %v517 = vld [vmem:[#allocation5 + $0x3e4] sm:$0xff]
        %v518 = vld [vmem:[#allocation5 + $0x3ec] sm:$0xf]
        %v519 = vld [vmem:[#allocation5 + $0x3f0] sm:$0xff]
        %v520 = vld [vmem:[#allocation5 + $0x3f8] sm:$0xf]
        %v521 = vld [vmem:[#allocation5 + $0x3fc] sm:$0xff]
        %v522 = vld [vmem:[#allocation5 + $0x404] sm:$0xf]
        %v523 = vld [vmem:[#allocation5 + $0x408] sm:$0xff]
        %v524 = vld [vmem:[#allocation5 + $0x410] sm:$0xf]
        %v525 = vld [vmem:[#allocation5 + $0x414] sm:$0xff]
        %v526 = vld [vmem:[#allocation5 + $0x41c] sm:$0xf]
        %v527 = vld [vmem:[#allocation5 + $0x420] sm:$0xff]
        %v528 = vld [vmem:[#allocation5 + $0x428] sm:$0xf]
        %v529 = vld [vmem:[#allocation5 + $0x42c] sm:$0xff]
        %v530 = vld [vmem:[#allocation5 + $0x434] sm:$0xf]
        %v531 = vld [vmem:[#allocation5 + $0x438] sm:$0xff]
        %v532 = vld [vmem:[#allocation5 + $0x440] sm:$0xf]
        %v533 = vld [vmem:[#allocation5 + $0x444] sm:$0xff]
        %v534 = vld [vmem:[#allocation5 + $0x44c] sm:$0xf]
        %v535 = vld [vmem:[#allocation5 + $0x450] sm:$0xff]
        %v536 = vld [vmem:[#allocation5 + $0x458] sm:$0xf]
        %v537 = vld [vmem:[#allocation5 + $0x45c] sm:$0xff]
        %v538 = vld [vmem:[#allocation5 + $0x464] sm:$0xf]
        %v539 = vld [vmem:[#allocation5 + $0x468] sm:$0xff]
        %v540 = vld [vmem:[#allocation5 + $0x470] sm:$0xf]
        %v541 = vld [vmem:[#allocation5 + $0x474] sm:$0xff]
        %v542 = vld [vmem:[#allocation5 + $0x47c] sm:$0xf]
        %v543 = vld [vmem:[%s2] sm:$0x7]
        %v545 = vperm.slane %v543, 0
        %v546 = vperm.slane %v543, 1
        %v547 = vperm.slane %v543, 2
        %v743 = vunpack.c.l.b16 %v351
        %v744 = vunpack.c.h.b16 %v351
        %v745 = vunpack.c.l.b16 %v352
        %v746 = vunpack.c.l.b16 %v353
        %v747 = vunpack.c.h.b16 %v353
        %v748 = vunpack.c.l.b16 %v354
        %v749 = vunpack.c.l.b16 %v355
        %v750 = vunpack.c.h.b16 %v355
        %v751 = vunpack.c.l.b16 %v356
        %v752 = vunpack.c.l.b16 %v357
        %v753 = vunpack.c.h.b16 %v357
        %v754 = vunpack.c.l.b16 %v358
        %v755 = vunpack.c.l.b16 %v359
        %v756 = vunpack.c.h.b16 %v359
        %v757 = vunpack.c.l.b16 %v360
        %v758 = vunpack.c.l.b16 %v361
        %v759 = vunpack.c.h.b16 %v361
        %v760 = vunpack.c.l.b16 %v362
        %v761 = vunpack.c.l.b16 %v363
        %v762 = vunpack.c.h.b16 %v363
        %v763 = vunpack.c.l.b16 %v364
        %v764 = vunpack.c.l.b16 %v365
        %v765 = vunpack.c.h.b16 %v365
        %v766 = vunpack.c.l.b16 %v366
        %v767 = vunpack.c.l.b16 %v367
        %v768 = vunpack.c.h.b16 %v367
        %v769 = vunpack.c.l.b16 %v368
        %v770 = vunpack.c.l.b16 %v369
        %v771 = vunpack.c.h.b16 %v369
        %v772 = vunpack.c.l.b16 %v370
        %v773 = vunpack.c.l.b16 %v371
        %v774 = vunpack.c.h.b16 %v371
        %v775 = vunpack.c.l.b16 %v372
        %v776 = vunpack.c.l.b16 %v373
        %v777 = vunpack.c.h.b16 %v373
        %v778 = vunpack.c.l.b16 %v374
        %v779 = vunpack.c.l.b16 %v375
        %v780 = vunpack.c.h.b16 %v375
        %v781 = vunpack.c.l.b16 %v376
        %v782 = vunpack.c.l.b16 %v377
        %v783 = vunpack.c.h.b16 %v377
        %v784 = vunpack.c.l.b16 %v378
        %v785 = vunpack.c.l.b16 %v379
        %v786 = vunpack.c.h.b16 %v379
        %v787 = vunpack.c.l.b16 %v380
        %v788 = vunpack.c.l.b16 %v381
        %v789 = vunpack.c.h.b16 %v381
        %v790 = vunpack.c.l.b16 %v382
        %v791 = vunpack.c.l.b16 %v383
        %v792 = vunpack.c.h.b16 %v383
        %v793 = vunpack.c.l.b16 %v384
        %v794 = vunpack.c.l.b16 %v385
        %v795 = vunpack.c.h.b16 %v385
        %v796 = vunpack.c.l.b16 %v386
        %v797 = vunpack.c.l.b16 %v387
        %v798 = vunpack.c.h.b16 %v387
        %v799 = vunpack.c.l.b16 %v388
        %v800 = vunpack.c.l.b16 %v389
        %v801 = vunpack.c.h.b16 %v389
        %v802 = vunpack.c.l.b16 %v390
        %v803 = vunpack.c.l.b16 %v391
        %v804 = vunpack.c.h.b16 %v391
        %v805 = vunpack.c.l.b16 %v392
        %v806 = vunpack.c.l.b16 %v393
        %v807 = vunpack.c.h.b16 %v393
        %v808 = vunpack.c.l.b16 %v394
        %v809 = vunpack.c.l.b16 %v395
        %v810 = vunpack.c.h.b16 %v395
        %v811 = vunpack.c.l.b16 %v396
        %v812 = vunpack.c.l.b16 %v397
        %v813 = vunpack.c.h.b16 %v397
        %v814 = vunpack.c.l.b16 %v398
        %v815 = vunpack.c.l.b16 %v399
        %v816 = vunpack.c.h.b16 %v399
        %v817 = vunpack.c.l.b16 %v400
        %v818 = vunpack.c.l.b16 %v401
        %v819 = vunpack.c.h.b16 %v401
        %v820 = vunpack.c.l.b16 %v402
        %v821 = vunpack.c.l.b16 %v403
        %v822 = vunpack.c.h.b16 %v403
        %v823 = vunpack.c.l.b16 %v404
        %v824 = vunpack.c.l.b16 %v405
        %v825 = vunpack.c.h.b16 %v405
        %v826 = vunpack.c.l.b16 %v406
        %v827 = vunpack.c.l.b16 %v407
        %v828 = vunpack.c.h.b16 %v407
        %v829 = vunpack.c.l.b16 %v408
        %v830 = vunpack.c.l.b16 %v409
        %v831 = vunpack.c.h.b16 %v409
        %v832 = vunpack.c.l.b16 %v410
        %v833 = vunpack.c.l.b16 %v411
        %v834 = vunpack.c.h.b16 %v411
        %v835 = vunpack.c.l.b16 %v412
        %v836 = vunpack.c.l.b16 %v413
        %v837 = vunpack.c.h.b16 %v413
        %v838 = vunpack.c.l.b16 %v414
        %v839 = vunpack.c.l.b16 %v415
        %v840 = vunpack.c.h.b16 %v415
        %v841 = vunpack.c.l.b16 %v416
        %v842 = vunpack.c.l.b16 %v417
        %v843 = vunpack.c.h.b16 %v417
        %v844 = vunpack.c.l.b16 %v418
        %v845 = vunpack.c.l.b16 %v419
        %v846 = vunpack.c.h.b16 %v419
        %v847 = vunpack.c.l.b16 %v420
        %v848 = vunpack.c.l.b16 %v421
        %v849 = vunpack.c.h.b16 %v421
        %v850 = vunpack.c.l.b16 %v422
        %v851 = vunpack.c.l.b16 %v423
        %v852 = vunpack.c.h.b16 %v423
        %v853 = vunpack.c.l.b16 %v424
        %v854 = vunpack.c.l.b16 %v425
        %v855 = vunpack.c.h.b16 %v425
        %v856 = vunpack.c.l.b16 %v426
        %v857 = vunpack.c.l.b16 %v427
        %v858 = vunpack.c.h.b16 %v427
        %v859 = vunpack.c.l.b16 %v428
        %v860 = vunpack.c.l.b16 %v429
        %v861 = vunpack.c.h.b16 %v429
        %v862 = vunpack.c.l.b16 %v430
        %v863 = vunpack.c.l.b16 %v431
        %v864 = vunpack.c.h.b16 %v431
        %v865 = vunpack.c.l.b16 %v432
        %v866 = vunpack.c.l.b16 %v433
        %v867 = vunpack.c.h.b16 %v433
        %v868 = vunpack.c.l.b16 %v434
        %v869 = vunpack.c.l.b16 %v435
        %v870 = vunpack.c.h.b16 %v435
        %v871 = vunpack.c.l.b16 %v436
        %v872 = vunpack.c.l.b16 %v437
        %v873 = vunpack.c.h.b16 %v437
        %v874 = vunpack.c.l.b16 %v438
        %v875 = vunpack.c.l.b16 %v439
        %v876 = vunpack.c.h.b16 %v439
        %v877 = vunpack.c.l.b16 %v440
        %v878 = vunpack.c.l.b16 %v441
        %v879 = vunpack.c.h.b16 %v441
        %v880 = vunpack.c.l.b16 %v442
        %v881 = vunpack.c.l.b16 %v443
        %v882 = vunpack.c.h.b16 %v443
        %v883 = vunpack.c.l.b16 %v444
        %v884 = vunpack.c.l.b16 %v445
        %v885 = vunpack.c.h.b16 %v445
        %v886 = vunpack.c.l.b16 %v446
        %v887 = vunpack.c.l.b16 %v447
        %v888 = vunpack.c.h.b16 %v447
        %v889 = vunpack.c.l.b16 %v448
        %v890 = vunpack.c.l.b16 %v449
        %v891 = vunpack.c.h.b16 %v449
        %v892 = vunpack.c.l.b16 %v450
        %v893 = vunpack.c.l.b16 %v451
        %v894 = vunpack.c.h.b16 %v451
        %v895 = vunpack.c.l.b16 %v452
        %v896 = vunpack.c.l.b16 %v453
        %v897 = vunpack.c.h.b16 %v453
        %v898 = vunpack.c.l.b16 %v454
        %v899 = vunpack.c.l.b16 %v455
        %v900 = vunpack.c.h.b16 %v455
        %v901 = vunpack.c.l.b16 %v456
        %v902 = vunpack.c.l.b16 %v457
        %v903 = vunpack.c.h.b16 %v457
        %v904 = vunpack.c.l.b16 %v458
        %v905 = vunpack.c.l.b16 %v459
        %v906 = vunpack.c.h.b16 %v459
        %v907 = vunpack.c.l.b16 %v460
        %v908 = vunpack.c.l.b16 %v461
        %v909 = vunpack.c.h.b16 %v461
        %v910 = vunpack.c.l.b16 %v462
        %v911 = vunpack.c.l.b16 %v463
        %v912 = vunpack.c.h.b16 %v463
        %v913 = vunpack.c.l.b16 %v464
        %v914 = vunpack.c.l.b16 %v465
        %v915 = vunpack.c.h.b16 %v465
        %v916 = vunpack.c.l.b16 %v466
        %v917 = vunpack.c.l.b16 %v467
        %v918 = vunpack.c.h.b16 %v467
        %v919 = vunpack.c.l.b16 %v468
        %v920 = vunpack.c.l.b16 %v469
        %v921 = vunpack.c.h.b16 %v469
        %v922 = vunpack.c.l.b16 %v470
        %v923 = vunpack.c.l.b16 %v471
        %v924 = vunpack.c.h.b16 %v471
        %v925 = vunpack.c.l.b16 %v472
        %v926 = vunpack.c.l.b16 %v473
        %v927 = vunpack.c.h.b16 %v473
        %v928 = vunpack.c.l.b16 %v474
        %v929 = vunpack.c.l.b16 %v475
        %v930 = vunpack.c.h.b16 %v475
        %v931 = vunpack.c.l.b16 %v476
        %v932 = vunpack.c.l.b16 %v477
        %v933 = vunpack.c.h.b16 %v477
        %v934 = vunpack.c.l.b16 %v478
        %v935 = vunpack.c.l.b16 %v479
        %v936 = vunpack.c.h.b16 %v479
        %v937 = vunpack.c.l.b16 %v480
        %v938 = vunpack.c.l.b16 %v481
        %v939 = vunpack.c.h.b16 %v481
        %v940 = vunpack.c.l.b16 %v482
        %v941 = vunpack.c.l.b16 %v483
        %v942 = vunpack.c.h.b16 %v483
        %v943 = vunpack.c.l.b16 %v484
        %v944 = vunpack.c.l.b16 %v485
        %v945 = vunpack.c.h.b16 %v485
        %v946 = vunpack.c.l.b16 %v486
        %v947 = vunpack.c.l.b16 %v487
        %v948 = vunpack.c.h.b16 %v487
        %v949 = vunpack.c.l.b16 %v488
        %v950 = vunpack.c.l.b16 %v489
        %v951 = vunpack.c.h.b16 %v489
        %v952 = vunpack.c.l.b16 %v490
        %v953 = vunpack.c.l.b16 %v491
        %v954 = vunpack.c.h.b16 %v491
        %v955 = vunpack.c.l.b16 %v492
        %v956 = vunpack.c.l.b16 %v493
        %v957 = vunpack.c.h.b16 %v493
        %v958 = vunpack.c.l.b16 %v494
        %v959 = vunpack.c.l.b16 %v495
        %v960 = vunpack.c.h.b16 %v495
        %v961 = vunpack.c.l.b16 %v496
        %v962 = vunpack.c.l.b16 %v497
        %v963 = vunpack.c.h.b16 %v497
        %v964 = vunpack.c.l.b16 %v498
        %v965 = vunpack.c.l.b16 %v499
        %v966 = vunpack.c.h.b16 %v499
        %v967 = vunpack.c.l.b16 %v500
        %v968 = vunpack.c.l.b16 %v501
        %v969 = vunpack.c.h.b16 %v501
        %v970 = vunpack.c.l.b16 %v502
        %v971 = vunpack.c.l.b16 %v503
        %v972 = vunpack.c.h.b16 %v503
        %v973 = vunpack.c.l.b16 %v504
        %v974 = vunpack.c.l.b16 %v505
        %v975 = vunpack.c.h.b16 %v505
        %v976 = vunpack.c.l.b16 %v506
        %v977 = vunpack.c.l.b16 %v507
        %v978 = vunpack.c.h.b16 %v507
        %v979 = vunpack.c.l.b16 %v508
        %v980 = vunpack.c.l.b16 %v509
        %v981 = vunpack.c.h.b16 %v509
        %v982 = vunpack.c.l.b16 %v510
        %v983 = vunpack.c.l.b16 %v511
        %v984 = vunpack.c.h.b16 %v511
        %v985 = vunpack.c.l.b16 %v512
        %v986 = vunpack.c.l.b16 %v513
        %v987 = vunpack.c.h.b16 %v513
        %v988 = vunpack.c.l.b16 %v514
        %v989 = vunpack.c.l.b16 %v515
        %v990 = vunpack.c.h.b16 %v515
        %v991 = vunpack.c.l.b16 %v516
        %v992 = vunpack.c.l.b16 %v517
        %v993 = vunpack.c.h.b16 %v517
        %v994 = vunpack.c.l.b16 %v518
        %v995 = vunpack.c.l.b16 %v519
        %v996 = vunpack.c.h.b16 %v519
        %v997 = vunpack.c.l.b16 %v520
        %v998 = vunpack.c.l.b16 %v521
        %v999 = vunpack.c.h.b16 %v521
        %v1000 = vunpack.c.l.b16 %v522
        %v1001 = vunpack.c.l.b16 %v523
        %v1002 = vunpack.c.h.b16 %v523
        %v1003 = vunpack.c.l.b16 %v524
        %v1004 = vunpack.c.l.b16 %v525
        %v1005 = vunpack.c.h.b16 %v525
        %v1006 = vunpack.c.l.b16 %v526
        %v1007 = vunpack.c.l.b16 %v527
        %v1008 = vunpack.c.h.b16 %v527
        %v1009 = vunpack.c.l.b16 %v528
        %v1010 = vunpack.c.l.b16 %v529
        %v1011 = vunpack.c.h.b16 %v529
        %v1012 = vunpack.c.l.b16 %v530
        %v1013 = vunpack.c.l.b16 %v531
        %v1014 = vunpack.c.h.b16 %v531
        %v1015 = vunpack.c.l.b16 %v532
        %v1016 = vunpack.c.l.b16 %v533
        %v1017 = vunpack.c.h.b16 %v533
        %v1018 = vunpack.c.l.b16 %v534
        %v1019 = vunpack.c.l.b16 %v535
        %v1020 = vunpack.c.h.b16 %v535
        %v1021 = vunpack.c.l.b16 %v536
        %v1022 = vunpack.c.l.b16 %v537
        %v1023 = vunpack.c.h.b16 %v537
        %v1024 = vunpack.c.l.b16 %v538
        %v1025 = vunpack.c.l.b16 %v539
        %v1026 = vunpack.c.h.b16 %v539
        %v1027 = vunpack.c.l.b16 %v540
        %v1028 = vunpack.c.l.b16 %v541
        %v1029 = vunpack.c.h.b16 %v541
        %v1030 = vunpack.c.l.b16 %v542
        %v1031 = vpack.c.b16 %v746, %v743
        %v1032 = vpack.c.b16 %v747, %v744
        %v1033 = vpack.c.b16 %v748, %v745
        %v1034 = vpack.c.b16 %v752, %v749
        %v1035 = vpack.c.b16 %v753, %v750
        %v1036 = vpack.c.b16 %v754, %v751
        %v1037 = vpack.c.b16 %v758, %v755
        %v1038 = vpack.c.b16 %v759, %v756
        %v1039 = vpack.c.b16 %v760, %v757
        %v1040 = vpack.c.b16 %v764, %v761
        %v1041 = vpack.c.b16 %v765, %v762
        %v1042 = vpack.c.b16 %v766, %v763
        %v1043 = vpack.c.b16 %v770, %v767
        %v1044 = vpack.c.b16 %v771, %v768
        %v1045 = vpack.c.b16 %v772, %v769
        %v1046 = vpack.c.b16 %v776, %v773
        %v1047 = vpack.c.b16 %v777, %v774
        %v1048 = vpack.c.b16 %v778, %v775
        %v1049 = vpack.c.b16 %v782, %v779
        %v1050 = vpack.c.b16 %v783, %v780
        %v1051 = vpack.c.b16 %v784, %v781
        %v1052 = vpack.c.b16 %v788, %v785
        %v1053 = vpack.c.b16 %v789, %v786
        %v1054 = vpack.c.b16 %v790, %v787
        %v1055 = vpack.c.b16 %v794, %v791
        %v1056 = vpack.c.b16 %v795, %v792
        %v1057 = vpack.c.b16 %v796, %v793
        %v1058 = vpack.c.b16 %v800, %v797
        %v1059 = vpack.c.b16 %v801, %v798
        %v1060 = vpack.c.b16 %v802, %v799
        %v1061 = vpack.c.b16 %v806, %v803
        %v1062 = vpack.c.b16 %v807, %v804
        %v1063 = vpack.c.b16 %v808, %v805
        %v1064 = vpack.c.b16 %v812, %v809
        %v1065 = vpack.c.b16 %v813, %v810
        %v1066 = vpack.c.b16 %v814, %v811
        %v1067 = vpack.c.b16 %v818, %v815
        %v1068 = vpack.c.b16 %v819, %v816
        %v1069 = vpack.c.b16 %v820, %v817
        %v1070 = vpack.c.b16 %v824, %v821
        %v1071 = vpack.c.b16 %v825, %v822
        %v1072 = vpack.c.b16 %v826, %v823
        %v1073 = vpack.c.b16 %v830, %v827
        %v1074 = vpack.c.b16 %v831, %v828
        %v1075 = vpack.c.b16 %v832, %v829
        %v1076 = vpack.c.b16 %v836, %v833
        %v1077 = vpack.c.b16 %v837, %v834
        %v1078 = vpack.c.b16 %v838, %v835
        %v1079 = vpack.c.b16 %v842, %v839
        %v1080 = vpack.c.b16 %v843, %v840
        %v1081 = vpack.c.b16 %v844, %v841
        %v1082 = vpack.c.b16 %v848, %v845
        %v1083 = vpack.c.b16 %v849, %v846
        %v1084 = vpack.c.b16 %v850, %v847
        %v1085 = vpack.c.b16 %v854, %v851
        %v1086 = vpack.c.b16 %v855, %v852
        %v1087 = vpack.c.b16 %v856, %v853
        %v1088 = vpack.c.b16 %v860, %v857
        %v1089 = vpack.c.b16 %v861, %v858
        %v1090 = vpack.c.b16 %v862, %v859
        %v1091 = vpack.c.b16 %v866, %v863
        %v1092 = vpack.c.b16 %v867, %v864
        %v1093 = vpack.c.b16 %v868, %v865
        %v1094 = vpack.c.b16 %v872, %v869
        %v1095 = vpack.c.b16 %v873, %v870
        %v1096 = vpack.c.b16 %v874, %v871
        %v1097 = vpack.c.b16 %v878, %v875
        %v1098 = vpack.c.b16 %v879, %v876
        %v1099 = vpack.c.b16 %v880, %v877
        %v1100 = vpack.c.b16 %v884, %v881
        %v1101 = vpack.c.b16 %v885, %v882
        %v1102 = vpack.c.b16 %v886, %v883
        %v1103 = vpack.c.b16 %v890, %v887
        %v1104 = vpack.c.b16 %v891, %v888
        %v1105 = vpack.c.b16 %v892, %v889
        %v1106 = vpack.c.b16 %v896, %v893
        %v1107 = vpack.c.b16 %v897, %v894
        %v1108 = vpack.c.b16 %v898, %v895
        %v1109 = vpack.c.b16 %v902, %v899
        %v1110 = vpack.c.b16 %v903, %v900
        %v1111 = vpack.c.b16 %v904, %v901
        %v1112 = vpack.c.b16 %v908, %v905
        %v1113 = vpack.c.b16 %v909, %v906
        %v1114 = vpack.c.b16 %v910, %v907
        %v1115 = vpack.c.b16 %v914, %v911
        %v1116 = vpack.c.b16 %v915, %v912
        %v1117 = vpack.c.b16 %v916, %v913
        %v1118 = vpack.c.b16 %v920, %v917
        %v1119 = vpack.c.b16 %v921, %v918
        %v1120 = vpack.c.b16 %v922, %v919
        %v1121 = vpack.c.b16 %v926, %v923
        %v1122 = vpack.c.b16 %v927, %v924
        %v1123 = vpack.c.b16 %v928, %v925
        %v1124 = vpack.c.b16 %v932, %v929
        %v1125 = vpack.c.b16 %v933, %v930
        %v1126 = vpack.c.b16 %v934, %v931
        %v1127 = vpack.c.b16 %v938, %v935
        %v1128 = vpack.c.b16 %v939, %v936
        %v1129 = vpack.c.b16 %v940, %v937
        %v1130 = vpack.c.b16 %v944, %v941
        %v1131 = vpack.c.b16 %v945, %v942
        %v1132 = vpack.c.b16 %v946, %v943
        %v1133 = vpack.c.b16 %v950, %v947
        %v1134 = vpack.c.b16 %v951, %v948
        %v1135 = vpack.c.b16 %v952, %v949
        %v1136 = vpack.c.b16 %v956, %v953
        %v1137 = vpack.c.b16 %v957, %v954
        %v1138 = vpack.c.b16 %v958, %v955
        %v1139 = vpack.c.b16 %v962, %v959
        %v1140 = vpack.c.b16 %v963, %v960
        %v1141 = vpack.c.b16 %v964, %v961
        %v1142 = vpack.c.b16 %v968, %v965
        %v1143 = vpack.c.b16 %v969, %v966
        %v1144 = vpack.c.b16 %v970, %v967
        %v1145 = vpack.c.b16 %v974, %v971
        %v1146 = vpack.c.b16 %v975, %v972
        %v1147 = vpack.c.b16 %v976, %v973
        %v1148 = vpack.c.b16 %v980, %v977
        %v1149 = vpack.c.b16 %v981, %v978
        %v1150 = vpack.c.b16 %v982, %v979
        %v1151 = vpack.c.b16 %v986, %v983
        %v1152 = vpack.c.b16 %v987, %v984
        %v1153 = vpack.c.b16 %v988, %v985
        %v1154 = vpack.c.b16 %v992, %v989
        %v1155 = vpack.c.b16 %v993, %v990
        %v1156 = vpack.c.b16 %v994, %v991
        %v1157 = vpack.c.b16 %v998, %v995
        %v1158 = vpack.c.b16 %v999, %v996
        %v1159 = vpack.c.b16 %v1000, %v997
        %v1160 = vpack.c.b16 %v1004, %v1001
        %v1161 = vpack.c.b16 %v1005, %v1002
        %v1162 = vpack.c.b16 %v1006, %v1003
        %v1163 = vpack.c.b16 %v1010, %v1007
        %v1164 = vpack.c.b16 %v1011, %v1008
        %v1165 = vpack.c.b16 %v1012, %v1009
        %v1166 = vpack.c.b16 %v1016, %v1013
        %v1167 = vpack.c.b16 %v1017, %v1014
        %v1168 = vpack.c.b16 %v1018, %v1015
        %v1169 = vpack.c.b16 %v1022, %v1019
        %v1170 = vpack.c.b16 %v1023, %v1020
        %v1171 = vpack.c.b16 %v1024, %v1021
        %v1172 = vpack.c.b16 %v1028, %v1025
        %v1173 = vpack.c.b16 %v1029, %v1026
        %v1174 = vpack.c.b16 %v1030, %v1027
        %1319 = vmatpush.bf16.msra.mxu0 %v1052
        %1320 = vmatpush.bf16.msra.mxu0 %v1049
        %1321 = vmatpush.bf16.msra.mxu0 %v1046
        %1322 = vmatpush.bf16.msra.mxu0 %v1043
        %1323 = vmatpush.bf16.msra.mxu0 %v1040
        %1324 = vmatpush.bf16.msra.mxu0 %v1037
        %1325 = vmatpush.bf16.msra.mxu0 %v1034
        %1326 = vmatpush.bf16.msra.mxu0 %v1031
        %1327 = vmatmul.bf16.gmra.mxu0 %v345
        %v1328 = vpop.f32.mrf.mxu0
        %v1329 = vadd.f32 %v545, %v1328
        %v1330 = vpop.f32.mrf.mxu0
        %v1331 = vadd.f32 %v545, %v1330
        %1332 = vdwg.mxu0
        %1333 = vmatpush.bf16.msra.mxu0 %v1076
        %1334 = vmatpush.bf16.msra.mxu0 %v1073
        %1335 = vmatpush.bf16.msra.mxu0 %v1070
        %1336 = vmatpush.bf16.msra.mxu0 %v1067
        %1337 = vmatpush.bf16.msra.mxu0 %v1064
        %1338 = vmatpush.bf16.msra.mxu0 %v1061
        %1339 = vmatpush.bf16.msra.mxu0 %v1058
        %1340 = vmatpush.bf16.msra.mxu0 %v1055
        %1341 = vmatmul.bf16.gmra.mxu0 %v346
        %v1342 = vpop.f32.mrf.mxu0
        %v1343 = vadd.f32 %v1329, %v1342
        %v1344 = vpop.f32.mrf.mxu0
        %v1345 = vadd.f32 %v1331, %v1344
        %1346 = vdwg.mxu0
        %1347 = vmatpush.bf16.msra.mxu0 %v1100
        %1348 = vmatpush.bf16.msra.mxu0 %v1097
        %1349 = vmatpush.bf16.msra.mxu0 %v1094
        %1350 = vmatpush.bf16.msra.mxu0 %v1091
        %1351 = vmatpush.bf16.msra.mxu0 %v1088
        %1352 = vmatpush.bf16.msra.mxu0 %v1085
        %1353 = vmatpush.bf16.msra.mxu0 %v1082
        %1354 = vmatpush.bf16.msra.mxu0 %v1079
        %1355 = vmatmul.bf16.gmra.mxu0 %v347
        %v1356 = vpop.f32.mrf.mxu0
        %v1357 = vadd.f32 %v1343, %v1356
        %v1358 = vpop.f32.mrf.mxu0
        %v1359 = vadd.f32 %v1345, %v1358
        %1360 = vdwg.mxu0
        %1361 = vmatpush.bf16.msra.mxu0 %v1124
        %1362 = vmatpush.bf16.msra.mxu0 %v1121
        %1363 = vmatpush.bf16.msra.mxu0 %v1118
        %1364 = vmatpush.bf16.msra.mxu0 %v1115
        %1365 = vmatpush.bf16.msra.mxu0 %v1112
        %1366 = vmatpush.bf16.msra.mxu0 %v1109
        %1367 = vmatpush.bf16.msra.mxu0 %v1106
        %1368 = vmatpush.bf16.msra.mxu0 %v1103
        %1369 = vmatmul.bf16.gmra.mxu0 %v348
        %v1370 = vpop.f32.mrf.mxu0
        %v1371 = vadd.f32 %v1357, %v1370
        %v1372 = vpop.f32.mrf.mxu0
        %v1373 = vadd.f32 %v1359, %v1372
        %1374 = vdwg.mxu0
        %1375 = vmatpush.bf16.msra.mxu0 %v1148
        %1376 = vmatpush.bf16.msra.mxu0 %v1145
        %1377 = vmatpush.bf16.msra.mxu0 %v1142
        %1378 = vmatpush.bf16.msra.mxu0 %v1139
        %1379 = vmatpush.bf16.msra.mxu0 %v1136
        %1380 = vmatpush.bf16.msra.mxu0 %v1133
        %1381 = vmatpush.bf16.msra.mxu0 %v1130
        %1382 = vmatpush.bf16.msra.mxu0 %v1127
        %1383 = vmatmul.bf16.gmra.mxu0 %v349
        %v1384 = vpop.f32.mrf.mxu0
        %v1385 = vadd.f32 %v1371, %v1384
        %v1386 = vpop.f32.mrf.mxu0
        %v1387 = vadd.f32 %v1373, %v1386
        %1388 = vdwg.mxu0
        %1389 = vmatpush.bf16.msra.mxu0 %v1172
        %1390 = vmatpush.bf16.msra.mxu0 %v1169
        %1391 = vmatpush.bf16.msra.mxu0 %v1166
        %1392 = vmatpush.bf16.msra.mxu0 %v1163
        %1393 = vmatpush.bf16.msra.mxu0 %v1160
        %1394 = vmatpush.bf16.msra.mxu0 %v1157
        %1395 = vmatpush.bf16.msra.mxu0 %v1154
        %1396 = vmatpush.bf16.msra.mxu0 %v1151
        %1397 = vmatmul.bf16.gmra.mxu0 %v350
        %v1398 = vpop.f32.mrf.mxu0
        %v1399 = vadd.f32 %v1385, %v1398
        %v1400 = vpop.f32.mrf.mxu0
        %v1401 = vadd.f32 %v1387, %v1400
        %1402 = vdwg.mxu0
        %1403 = vmatpush.bf16.msra.mxu0 %v1053
        %1404 = vmatpush.bf16.msra.mxu0 %v1050
        %1405 = vmatpush.bf16.msra.mxu0 %v1047
        %1406 = vmatpush.bf16.msra.mxu0 %v1044
        %1407 = vmatpush.bf16.msra.mxu0 %v1041
        %1408 = vmatpush.bf16.msra.mxu0 %v1038
        %1409 = vmatpush.bf16.msra.mxu0 %v1035
        %1410 = vmatpush.bf16.msra.mxu0 %v1032
        %1411 = vmatmul.bf16.gmra.mxu0 %v345
        %v1412 = vpop.f32.mrf.mxu0
        %v1413 = vadd.f32 %v546, %v1412
        %v1414 = vpop.f32.mrf.mxu0
        %v1415 = vadd.f32 %v546, %v1414
        %1416 = vdwg.mxu0
        %1417 = vmatpush.bf16.msra.mxu0 %v1077
        %1418 = vmatpush.bf16.msra.mxu0 %v1074
        %1419 = vmatpush.bf16.msra.mxu0 %v1071
        %1420 = vmatpush.bf16.msra.mxu0 %v1068
        %1421 = vmatpush.bf16.msra.mxu0 %v1065
        %1422 = vmatpush.bf16.msra.mxu0 %v1062
        %1423 = vmatpush.bf16.msra.mxu0 %v1059
        %1424 = vmatpush.bf16.msra.mxu0 %v1056
        %1425 = vmatmul.bf16.gmra.mxu0 %v346
        %v1426 = vpop.f32.mrf.mxu0
        %v1427 = vadd.f32 %v1413, %v1426
        %v1428 = vpop.f32.mrf.mxu0
        %v1429 = vadd.f32 %v1415, %v1428
        %1430 = vdwg.mxu0
        %1431 = vmatpush.bf16.msra.mxu0 %v1101
        %1432 = vmatpush.bf16.msra.mxu0 %v1098
        %1433 = vmatpush.bf16.msra.mxu0 %v1095
        %1434 = vmatpush.bf16.msra.mxu0 %v1092
        %1435 = vmatpush.bf16.msra.mxu0 %v1089
        %1436 = vmatpush.bf16.msra.mxu0 %v1086
        %1437 = vmatpush.bf16.msra.mxu0 %v1083
        %1438 = vmatpush.bf16.msra.mxu0 %v1080
        %1439 = vmatmul.bf16.gmra.mxu0 %v347
        %v1440 = vpop.f32.mrf.mxu0
        %v1441 = vadd.f32 %v1427, %v1440
        %v1442 = vpop.f32.mrf.mxu0
        %v1443 = vadd.f32 %v1429, %v1442
        %1444 = vdwg.mxu0
        %1445 = vmatpush.bf16.msra.mxu0 %v1125
        %1446 = vmatpush.bf16.msra.mxu0 %v1122
        %1447 = vmatpush.bf16.msra.mxu0 %v1119
        %1448 = vmatpush.bf16.msra.mxu0 %v1116
        %1449 = vmatpush.bf16.msra.mxu0 %v1113
        %1450 = vmatpush.bf16.msra.mxu0 %v1110
        %1451 = vmatpush.bf16.msra.mxu0 %v1107
        %1452 = vmatpush.bf16.msra.mxu0 %v1104
        %1453 = vmatmul.bf16.gmra.mxu0 %v348
        %v1454 = vpop.f32.mrf.mxu0
        %v1455 = vadd.f32 %v1441, %v1454
        %v1456 = vpop.f32.mrf.mxu0
        %v1457 = vadd.f32 %v1443, %v1456
        %1458 = vdwg.mxu0
        %1459 = vmatpush.bf16.msra.mxu0 %v1149
        %1460 = vmatpush.bf16.msra.mxu0 %v1146
        %1461 = vmatpush.bf16.msra.mxu0 %v1143
        %1462 = vmatpush.bf16.msra.mxu0 %v1140
        %1463 = vmatpush.bf16.msra.mxu0 %v1137
        %1464 = vmatpush.bf16.msra.mxu0 %v1134
        %1465 = vmatpush.bf16.msra.mxu0 %v1131
        %1466 = vmatpush.bf16.msra.mxu0 %v1128
        %1467 = vmatmul.bf16.gmra.mxu0 %v349
        %v1468 = vpop.f32.mrf.mxu0
        %v1469 = vadd.f32 %v1455, %v1468
        %v1470 = vpop.f32.mrf.mxu0
        %v1471 = vadd.f32 %v1457, %v1470
        %1472 = vdwg.mxu0
        %1473 = vmatpush.bf16.msra.mxu0 %v1173
        %1474 = vmatpush.bf16.msra.mxu0 %v1170
        %1475 = vmatpush.bf16.msra.mxu0 %v1167
        %1476 = vmatpush.bf16.msra.mxu0 %v1164
        %1477 = vmatpush.bf16.msra.mxu0 %v1161
        %1478 = vmatpush.bf16.msra.mxu0 %v1158
        %1479 = vmatpush.bf16.msra.mxu0 %v1155
        %1480 = vmatpush.bf16.msra.mxu0 %v1152
        %1481 = vmatmul.bf16.gmra.mxu0 %v350
        %v1482 = vpop.f32.mrf.mxu0
        %v1483 = vadd.f32 %v1469, %v1482
        %v1484 = vpop.f32.mrf.mxu0
        %v1485 = vadd.f32 %v1471, %v1484
        %1486 = vdwg.mxu0
        %1487 = vmatpush.bf16.msra.mxu0 %v1054
        %1488 = vmatpush.bf16.msra.mxu0 %v1051
        %1489 = vmatpush.bf16.msra.mxu0 %v1048
        %1490 = vmatpush.bf16.msra.mxu0 %v1045
        %1491 = vmatpush.bf16.msra.mxu0 %v1042
        %1492 = vmatpush.bf16.msra.mxu0 %v1039
        %1493 = vmatpush.bf16.msra.mxu0 %v1036
        %1494 = vmatpush.bf16.msra.mxu0 %v1033
        %1495 = vmatmul.bf16.gmra.mxu0 %v345
        %v1496 = vpop.f32.mrf.mxu0
        %v1497 = vadd.f32 %v547, %v1496
        %v1498 = vpop.f32.mrf.mxu0
        %v1499 = vadd.f32 %v547, %v1498
        %1500 = vdwg.mxu0
        %1501 = vmatpush.bf16.msra.mxu0 %v1078
        %1502 = vmatpush.bf16.msra.mxu0 %v1075
        %1503 = vmatpush.bf16.msra.mxu0 %v1072
        %1504 = vmatpush.bf16.msra.mxu0 %v1069
        %1505 = vmatpush.bf16.msra.mxu0 %v1066
        %1506 = vmatpush.bf16.msra.mxu0 %v1063
        %1507 = vmatpush.bf16.msra.mxu0 %v1060
        %1508 = vmatpush.bf16.msra.mxu0 %v1057
        %1509 = vmatmul.bf16.gmra.mxu0 %v346
        %v1510 = vpop.f32.mrf.mxu0
        %v1511 = vadd.f32 %v1497, %v1510
        %v1512 = vpop.f32.mrf.mxu0
        %v1513 = vadd.f32 %v1499, %v1512
        %1514 = vdwg.mxu0
        %1515 = vmatpush.bf16.msra.mxu0 %v1102
        %1516 = vmatpush.bf16.msra.mxu0 %v1099
        %1517 = vmatpush.bf16.msra.mxu0 %v1096
        %1518 = vmatpush.bf16.msra.mxu0 %v1093
        %1519 = vmatpush.bf16.msra.mxu0 %v1090
        %1520 = vmatpush.bf16.msra.mxu0 %v1087
        %1521 = vmatpush.bf16.msra.mxu0 %v1084
        %1522 = vmatpush.bf16.msra.mxu0 %v1081
        %1523 = vmatmul.bf16.gmra.mxu0 %v347
        %v1524 = vpop.f32.mrf.mxu0
        %v1525 = vadd.f32 %v1511, %v1524
        %v1526 = vpop.f32.mrf.mxu0
        %v1527 = vadd.f32 %v1513, %v1526
        %1528 = vdwg.mxu0
        %1529 = vmatpush.bf16.msra.mxu0 %v1126
        %1530 = vmatpush.bf16.msra.mxu0 %v1123
        %1531 = vmatpush.bf16.msra.mxu0 %v1120
        %1532 = vmatpush.bf16.msra.mxu0 %v1117
        %1533 = vmatpush.bf16.msra.mxu0 %v1114
        %1534 = vmatpush.bf16.msra.mxu0 %v1111
        %1535 = vmatpush.bf16.msra.mxu0 %v1108
        %1536 = vmatpush.bf16.msra.mxu0 %v1105
        %1537 = vmatmul.bf16.gmra.mxu0 %v348
        %v1538 = vpop.f32.mrf.mxu0
        %v1539 = vadd.f32 %v1525, %v1538
        %v1540 = vpop.f32.mrf.mxu0
        %v1541 = vadd.f32 %v1527, %v1540
        %1542 = vdwg.mxu0
        %1543 = vmatpush.bf16.msra.mxu0 %v1150
        %1544 = vmatpush.bf16.msra.mxu0 %v1147
        %1545 = vmatpush.bf16.msra.mxu0 %v1144
        %1546 = vmatpush.bf16.msra.mxu0 %v1141
        %1547 = vmatpush.bf16.msra.mxu0 %v1138
        %1548 = vmatpush.bf16.msra.mxu0 %v1135
        %1549 = vmatpush.bf16.msra.mxu0 %v1132
        %1550 = vmatpush.bf16.msra.mxu0 %v1129
        %1551 = vmatmul.bf16.gmra.mxu0 %v349
        %v1552 = vpop.f32.mrf.mxu0
        %v1553 = vadd.f32 %v1539, %v1552
        %v1554 = vpop.f32.mrf.mxu0
        %v1555 = vadd.f32 %v1541, %v1554
        %1556 = vdwg.mxu0
        %1557 = vmatpush.bf16.msra.mxu0 %v1174
        %1558 = vmatpush.bf16.msra.mxu0 %v1171
        %1559 = vmatpush.bf16.msra.mxu0 %v1168
        %1560 = vmatpush.bf16.msra.mxu0 %v1165
        %1561 = vmatpush.bf16.msra.mxu0 %v1162
        %1562 = vmatpush.bf16.msra.mxu0 %v1159
        %1563 = vmatpush.bf16.msra.mxu0 %v1156
        %1564 = vmatpush.bf16.msra.mxu0 %v1153
        %1565 = vmatmul.bf16.gmra.mxu0 %v350
        %v1566 = vpop.f32.mrf.mxu0
        %v1567 = vadd.f32 %v1553, %v1566
        %v1568 = vpop.f32.mrf.mxu0
        %v1569 = vadd.f32 %v1555, %v1568
        %1570 = vdwg.mxu0
        %v1571 = vmax.f32 %v1399, 0.0
        %v1572 = vmax.f32 %v1483, 0.0
        %v1573 = vmax.f32 %v1567, 0.0
        %v1574 = vmax.f32 %v1401, 0.0
        %v1575 = vmax.f32 %v1485, 0.0
        %v1576 = vmax.f32 %v1569, 0.0
        %v1577 = vpack.c.bf16 %v1574, %v1571
        %v1578 = vpack.c.bf16 %v1575, %v1572
        %v1579 = vpack.c.bf16 %v1576, %v1573
        %v1580 = vld [vmem:[#allocation7] sm:$0xf]
        %v1581 = vld [vmem:[#allocation7 + $0x4] sm:$0xf]
        %v1582 = vld [vmem:[#allocation7 + $0x8] sm:$0xf]
        %v1583 = vld [vmem:[#allocation7 + $0xc] sm:$0xf]
        %v1584 = vld [vmem:[#allocation7 + $0x10] sm:$0xf]
        %v1585 = vld [vmem:[#allocation7 + $0x14] sm:$0xf]
        %v1586 = vld [vmem:[#allocation7 + $0x18] sm:$0xf]
        %v1587 = vld [vmem:[#allocation7 + $0x1c] sm:$0xf]
        %v1588 = vld [vmem:[#allocation7 + $0x20] sm:$0xf]
        %v1589 = vld [vmem:[#allocation7 + $0x24] sm:$0xf]
        %v1590 = vld [vmem:[#allocation7 + $0x28] sm:$0xf]
        %v1591 = vld [vmem:[#allocation7 + $0x2c] sm:$0xf]
        %v1592 = vld [vmem:[#allocation7 + $0x30] sm:$0xf]
        %v1593 = vld [vmem:[#allocation7 + $0x34] sm:$0xf]
        %v1594 = vld [vmem:[#allocation7 + $0x38] sm:$0xf]
        %v1595 = vld [vmem:[#allocation7 + $0x3c] sm:$0xf]
        %v1596 = vld [vmem:[#allocation7 + $0x40] sm:$0xf]
        %v1597 = vld [vmem:[#allocation7 + $0x44] sm:$0xf]
        %v1598 = vld [vmem:[#allocation7 + $0x48] sm:$0xf]
        %v1599 = vld [vmem:[#allocation7 + $0x4c] sm:$0xf]
        %v1600 = vld [vmem:[#allocation7 + $0x50] sm:$0xf]
        %v1601 = vld [vmem:[#allocation7 + $0x54] sm:$0xf]
        %v1602 = vld [vmem:[#allocation7 + $0x58] sm:$0xf]
        %v1603 = vld [vmem:[#allocation7 + $0x5c] sm:$0xf]
        %v1604 = vld [vmem:[#allocation7 + $0x60] sm:$0xf]
        %v1605 = vld [vmem:[#allocation7 + $0x64] sm:$0xf]
        %v1606 = vld [vmem:[#allocation7 + $0x68] sm:$0xf]
        %v1607 = vld [vmem:[#allocation7 + $0x6c] sm:$0xf]
        %v1608 = vld [vmem:[#allocation7 + $0x70] sm:$0xf]
        %v1609 = vld [vmem:[#allocation7 + $0x74] sm:$0xf]
        %v1610 = vld [vmem:[#allocation7 + $0x78] sm:$0xf]
        %v1611 = vld [vmem:[#allocation7 + $0x7c] sm:$0xf]
        %v1612 = vld [vmem:[#allocation7 + $0x80] sm:$0xf]
        %v1613 = vld [vmem:[#allocation7 + $0x84] sm:$0xf]
        %v1614 = vld [vmem:[#allocation7 + $0x88] sm:$0xf]
        %v1615 = vld [vmem:[#allocation7 + $0x8c] sm:$0xf]
        %v1616 = vld [vmem:[#allocation7 + $0x90] sm:$0xf]
        %v1617 = vld [vmem:[#allocation7 + $0x94] sm:$0xf]
        %v1618 = vld [vmem:[#allocation7 + $0x98] sm:$0xf]
        %v1619 = vld [vmem:[#allocation7 + $0x9c] sm:$0xf]
        %v1620 = vld [vmem:[#allocation7 + $0xa0] sm:$0xf]
        %v1621 = vld [vmem:[#allocation7 + $0xa4] sm:$0xf]
        %v1622 = vld [vmem:[#allocation7 + $0xa8] sm:$0xf]
        %v1623 = vld [vmem:[#allocation7 + $0xac] sm:$0xf]
        %v1624 = vld [vmem:[#allocation7 + $0xb0] sm:$0xf]
        %v1625 = vld [vmem:[#allocation7 + $0xb4] sm:$0xf]
        %v1626 = vld [vmem:[#allocation7 + $0xb8] sm:$0xf]
        %v1627 = vld [vmem:[#allocation7 + $0xbc] sm:$0xf]
        %v1628 = vld [vmem:[%s4] sm:$0x1]
        %v1630 = vperm.slane %v1628, 0
        %v1680 = vunpack.c.l.b16 %v1580
        %v1681 = vunpack.c.l.b16 %v1581
        %v1682 = vunpack.c.l.b16 %v1582
        %v1683 = vunpack.c.l.b16 %v1583
        %v1684 = vunpack.c.l.b16 %v1584
        %v1685 = vunpack.c.l.b16 %v1585
        %v1686 = vunpack.c.l.b16 %v1586
        %v1687 = vunpack.c.l.b16 %v1587
        %v1688 = vunpack.c.l.b16 %v1588
        %v1689 = vunpack.c.l.b16 %v1589
        %v1690 = vunpack.c.l.b16 %v1590
        %v1691 = vunpack.c.l.b16 %v1591
        %v1692 = vunpack.c.l.b16 %v1592
        %v1693 = vunpack.c.l.b16 %v1593
        %v1694 = vunpack.c.l.b16 %v1594
        %v1695 = vunpack.c.l.b16 %v1595
        %v1696 = vunpack.c.l.b16 %v1596
        %v1697 = vunpack.c.l.b16 %v1597
        %v1698 = vunpack.c.l.b16 %v1598
        %v1699 = vunpack.c.l.b16 %v1599
        %v1700 = vunpack.c.l.b16 %v1600
        %v1701 = vunpack.c.l.b16 %v1601
        %v1702 = vunpack.c.l.b16 %v1602
        %v1703 = vunpack.c.l.b16 %v1603
        %v1704 = vunpack.c.l.b16 %v1604
        %v1705 = vunpack.c.l.b16 %v1605
        %v1706 = vunpack.c.l.b16 %v1606
        %v1707 = vunpack.c.l.b16 %v1607
        %v1708 = vunpack.c.l.b16 %v1608
        %v1709 = vunpack.c.l.b16 %v1609
        %v1710 = vunpack.c.l.b16 %v1610
        %v1711 = vunpack.c.l.b16 %v1611
        %v1712 = vunpack.c.l.b16 %v1612
        %v1713 = vunpack.c.l.b16 %v1613
        %v1714 = vunpack.c.l.b16 %v1614
        %v1715 = vunpack.c.l.b16 %v1615
        %v1716 = vunpack.c.l.b16 %v1616
        %v1717 = vunpack.c.l.b16 %v1617
        %v1718 = vunpack.c.l.b16 %v1618
        %v1719 = vunpack.c.l.b16 %v1619
        %v1720 = vunpack.c.l.b16 %v1620
        %v1721 = vunpack.c.l.b16 %v1621
        %v1722 = vunpack.c.l.b16 %v1622
        %v1723 = vunpack.c.l.b16 %v1623
        %v1724 = vunpack.c.l.b16 %v1624
        %v1725 = vunpack.c.l.b16 %v1625
        %v1726 = vunpack.c.l.b16 %v1626
        %v1727 = vunpack.c.l.b16 %v1627
        %v1728 = vpack.c.b16 %v1681, %v1680
        %v1729 = vpack.c.b16 %v1683, %v1682
        %v1730 = vpack.c.b16 %v1685, %v1684
        %v1731 = vpack.c.b16 %v1687, %v1686
        %v1732 = vpack.c.b16 %v1689, %v1688
        %v1733 = vpack.c.b16 %v1691, %v1690
        %v1734 = vpack.c.b16 %v1693, %v1692
        %v1735 = vpack.c.b16 %v1695, %v1694
        %v1736 = vpack.c.b16 %v1697, %v1696
        %v1737 = vpack.c.b16 %v1699, %v1698
        %v1738 = vpack.c.b16 %v1701, %v1700
        %v1739 = vpack.c.b16 %v1703, %v1702
        %v1740 = vpack.c.b16 %v1705, %v1704
        %v1741 = vpack.c.b16 %v1707, %v1706
        %v1742 = vpack.c.b16 %v1709, %v1708
        %v1743 = vpack.c.b16 %v1711, %v1710
        %v1744 = vpack.c.b16 %v1713, %v1712
        %v1745 = vpack.c.b16 %v1715, %v1714
        %v1746 = vpack.c.b16 %v1717, %v1716
        %v1747 = vpack.c.b16 %v1719, %v1718
        %v1748 = vpack.c.b16 %v1721, %v1720
        %v1749 = vpack.c.b16 %v1723, %v1722
        %v1750 = vpack.c.b16 %v1725, %v1724
        %v1751 = vpack.c.b16 %v1727, %v1726
        %1776 = vmatpush.bf16.msra.mxu0 %v1735
        %1777 = vmatpush.bf16.msra.mxu0 %v1734
        %1778 = vmatpush.bf16.msra.mxu0 %v1733
        %1779 = vmatpush.bf16.msra.mxu0 %v1732
        %1780 = vmatpush.bf16.msra.mxu0 %v1731
        %1781 = vmatpush.bf16.msra.mxu0 %v1730
        %1782 = vmatpush.bf16.msra.mxu0 %v1729
        %1783 = vmatpush.bf16.msra.mxu0 %v1728
        %1784 = vmatmul.bf16.gmra.mxu0 %v1577
        %v1785 = vpop.f32.mrf.mxu0
        %v1786 = vadd.f32 %v1630, %v1785
        %v1787 = vpop.f32.mrf.mxu0
        %v1788 = vadd.f32 %v1630, %v1787
        %1789 = vdwg.mxu0
        %1790 = vmatpush.bf16.msra.mxu0 %v1743
        %1791 = vmatpush.bf16.msra.mxu0 %v1742
        %1792 = vmatpush.bf16.msra.mxu0 %v1741
        %1793 = vmatpush.bf16.msra.mxu0 %v1740
        %1794 = vmatpush.bf16.msra.mxu0 %v1739
        %1795 = vmatpush.bf16.msra.mxu0 %v1738
        %1796 = vmatpush.bf16.msra.mxu0 %v1737
        %1797 = vmatpush.bf16.msra.mxu0 %v1736
        %1798 = vmatmul.bf16.gmra.mxu0 %v1578
        %v1799 = vpop.f32.mrf.mxu0
        %v1800 = vadd.f32 %v1786, %v1799
        %v1801 = vpop.f32.mrf.mxu0
        %v1802 = vadd.f32 %v1788, %v1801
        %1803 = vdwg.mxu0
        %1804 = vmatpush.bf16.msra.mxu0 %v1751
        %1805 = vmatpush.bf16.msra.mxu0 %v1750
        %1806 = vmatpush.bf16.msra.mxu0 %v1749
        %1807 = vmatpush.bf16.msra.mxu0 %v1748
        %1808 = vmatpush.bf16.msra.mxu0 %v1747
        %1809 = vmatpush.bf16.msra.mxu0 %v1746
        %1810 = vmatpush.bf16.msra.mxu0 %v1745
        %1811 = vmatpush.bf16.msra.mxu0 %v1744
        %1812 = vmatmul.bf16.gmra.mxu0 %v1579
        %v1813 = vpop.f32.mrf.mxu0
        %v1814 = vadd.f32 %v1800, %v1813
        %v1815 = vpop.f32.mrf.mxu0
        %v1816 = vadd.f32 %v1802, %v1815
        %1817 = vdwg.mxu0
        %v1818 = vmax.f32 %v1814, 0.0
        %v1819 = vmax.f32 %v1816, 0.0
        %v1820 = vpack.c.bf16 %v1819, %v1818
        %v1821 = vld [vmem:[%s5] sm:$0xf]
        %v1822 = vld [vmem:[%s5 + $0x4] sm:$0xf]
        %v1823 = vld [vmem:[%s5 + $0x8] sm:$0xf]
        %v1824 = vld [vmem:[%s5 + $0xc] sm:$0xf]
        %v1825 = vld [vmem:[%s5 + $0x10] sm:$0xf]
        %v1826 = vld [vmem:[%s5 + $0x14] sm:$0xf]
        %v1827 = vld [vmem:[%s5 + $0x18] sm:$0xf]
        %v1828 = vld [vmem:[%s5 + $0x1c] sm:$0xf]
        %v1829 = vld [vmem:[%s5 + $0x20] sm:$0xf]
        %v1830 = vld [vmem:[%s5 + $0x24] sm:$0xf]
        %v1831 = vld [vmem:[%s5 + $0x28] sm:$0xf]
        %v1832 = vld [vmem:[%s5 + $0x2c] sm:$0xf]
        %v1833 = vld [vmem:[%s5 + $0x30] sm:$0xf]
        %v1834 = vld [vmem:[%s5 + $0x34] sm:$0xf]
        %v1835 = vld [vmem:[%s5 + $0x38] sm:$0xf]
        %v1836 = vld [vmem:[%s5 + $0x3c] sm:$0xf]
        %v1837 = vld [vmem:[%s6] sm:$0x1]
        %v1839 = vperm.slane %v1837, 0
        %v1857 = vunpack.c.l.b16 %v1821
        %v1858 = vunpack.c.l.b16 %v1822
        %v1859 = vunpack.c.l.b16 %v1823
        %v1860 = vunpack.c.l.b16 %v1824
        %v1861 = vunpack.c.l.b16 %v1825
        %v1862 = vunpack.c.l.b16 %v1826
        %v1863 = vunpack.c.l.b16 %v1827
        %v1864 = vunpack.c.l.b16 %v1828
        %v1865 = vunpack.c.l.b16 %v1829
        %v1866 = vunpack.c.l.b16 %v1830
        %v1867 = vunpack.c.l.b16 %v1831
        %v1868 = vunpack.c.l.b16 %v1832
        %v1869 = vunpack.c.l.b16 %v1833
        %v1870 = vunpack.c.l.b16 %v1834
        %v1871 = vunpack.c.l.b16 %v1835
        %v1872 = vunpack.c.l.b16 %v1836
        %v1873 = vpack.c.b16 %v1858, %v1857
        %v1874 = vpack.c.b16 %v1860, %v1859
        %v1875 = vpack.c.b16 %v1862, %v1861
        %v1876 = vpack.c.b16 %v1864, %v1863
        %v1877 = vpack.c.b16 %v1866, %v1865
        %v1878 = vpack.c.b16 %v1868, %v1867
        %v1879 = vpack.c.b16 %v1870, %v1869
        %v1880 = vpack.c.b16 %v1872, %v1871
        %1889 = vmatpush.bf16.msra.mxu0 %v1880
        %1890 = vmatpush.bf16.msra.mxu0 %v1879
        %1891 = vmatpush.bf16.msra.mxu0 %v1878
        %1892 = vmatpush.bf16.msra.mxu0 %v1877
        %1893 = vmatpush.bf16.msra.mxu0 %v1876
        %1894 = vmatpush.bf16.msra.mxu0 %v1875
        %1895 = vmatpush.bf16.msra.mxu0 %v1874
        %1896 = vmatpush.bf16.msra.mxu0 %v1873
        %1897 = vmatmul.bf16.gmra.mxu0 %v1820
        %v1898 = vpop.f32.mrf.mxu0
        %v1899 = vadd.f32 %v1839, %v1898
        %v1900 = vpop.f32.mrf.mxu0
        %v1901 = vadd.f32 %v1839, %v1900
        %1902 = vdwg.mxu0
        %v1903 = vmax.f32 %v1899, 0.0
        %v1904 = vmax.f32 %v1901, 0.0
        %p1905 = scmp.lt.s32.totalorder %s25, 2
        // Predicated region
        $region61: #{tpu_custom_call.1} parent=47 // pred_check
          %p1906 = pneg %p1905
        $region62: #{tpu_custom_call.1} parent=47 // pred_check_branch
          %1908 = sbr.rel (%p1906) target = $region64
        $region63: #{tpu_custom_call.1} parent=47 // pred_region
          %vm1909 = vcmask 261120
          %v1910 = vsel %vm1909, %v1903, 0.0
          %v1911 = vsel %vm1909, %v1904, 0.0
          %v1912 = vadd.f32 %v1910, %v1911
          %v1913 = vrot.slane %v1912, 4
          %v1914 = vadd.f32 %v1912, %v1913
          %v1915 = vrot.slane %v1914, 2
          %v1916 = vadd.f32 %v1914, %v1915
          %v1917 = vrot.slane %v1916, 1
          %v1918 = vadd.f32 %v1916, %v1917
          %vm1919 = vcmask 253952
          %1920 = vst.msk [vmem:[%s331] sm:$0x1] %vm1919, %v1918
        $region64: #{tpu_custom_call.1} parent=47 // pred_fallthru
          _
        %p1921 = scmp.eq.s32.totalorder %s25, 2
        // Predicated region
        $region65: #{tpu_custom_call.1} parent=47 // pred_check
          %p1922 = pneg %p1921
        $region66: #{tpu_custom_call.1} parent=47 // pred_check_branch
          %1924 = sbr.rel (%p1922) target = $region68
        $region67: #{tpu_custom_call.1} parent=47 // pred_region
          %s1925 = smul.u32 %s25, 16
          %v1926 = vlaneseq
          %v1927 = vshrl.u32 %v1926, 7
          %v1928 = vadd.s32 %v1927, 8
          %v1929 = vstv %s1925
          %v1930 = vadd.s32 %v1929, %v1927
          %v1931 = vadd.s32 %v1929, %v1928
          %vm1932 = vcmp.lt.s32.totalorder %v1930, 40
          %vm1933 = vcmp.lt.s32.totalorder %v1931, 40
          %v1934 = vsel %vm1932, %v1903, 0.0
          %v1935 = vsel %vm1933, %v1904, 0.0
          %vm1936 = vcmask 261120
          %v1937 = vsel %vm1936, %v1934, 0.0
          %v1938 = vsel %vm1936, %v1935, 0.0
          %v1939 = vadd.f32 %v1937, %v1938
          %v1940 = vrot.slane %v1939, 4
          %v1941 = vadd.f32 %v1939, %v1940
          %v1942 = vrot.slane %v1941, 2
          %v1943 = vadd.f32 %v1941, %v1942
          %v1944 = vrot.slane %v1943, 1
          %v1945 = vadd.f32 %v1943, %v1944
          %vm1946 = vcmask 253952
          %1947 = vst.msk [vmem:[%s331] sm:$0x1] %vm1946, %v1945
        $region68: #{tpu_custom_call.1} parent=47 // pred_fallthru
          _
        %s1948 = sand.u32 %s185, 1
        %s1949 = scalar_lea.sflag [#allocation4], %s1948
        %s1950 = sand.u32 %s185, 1
        %s1951 = scalar_lea.vmem [#allocation8], %s1950
        // Predicated region
        $region69: #{tpu_custom_call.1} parent=47 // pred_check
          %p1952 = pneg %p195
        $region70: #{tpu_custom_call.1} parent=47 // pred_check_branch
          %1954 = sbr.rel (%p1952) target = $region72
        $region71: #{tpu_custom_call.1} parent=47 // pred_region
          %1956 = vsyncadd %s1949, 0
          %s1957 = scalar_lea.hbm %s7, %s25
          %s1959 = sshll.u32 %s1951, 4
          %s1960 = int_to_ptr.vmem [resolvable:$true] %s1959
          %s1961 = sshll.u32 %s1957, 4
          %s1962 = int_to_ptr.hbm [resolvable:$true] %s1961
          %1964 = dma.vmem_to_hbm [thread:$0]  %s1960, 16, %s1962, %s1949
        $region72: #{tpu_custom_call.1} parent=47 // pred_fallthru
          _
      $region48: #{tpu_custom_call.1} parent=5 // pred_fallthru
        _
      %p1965 = scmp.le.s32.totalorder 2, %s20
      // Predicated region
      $region73: #{tpu_custom_call.1} parent=5 // pred_check
        %p1966 = pneg %p1965
      $region74: #{tpu_custom_call.1} parent=5 // pred_check_branch
        %1968 = sbr.rel (%p1966) target = $region76
      $region75: #{tpu_custom_call.1} parent=5 // pred_region
        %s1969 = ssub.s32 %s20, 2
        // Predicated region
        $region77: #{tpu_custom_call.1} parent=75 // pred_check
          %p1970 = pneg %p201
        $region78: #{tpu_custom_call.1} parent=75 // pred_check_branch
          %1972 = sbr.rel (%p1970) target = $region80
        $region79: #{tpu_custom_call.1} parent=75 // pred_region
          %s1973 = sand.u32 %s186, 1
          %s1974 = scalar_lea.sflag [#allocation4], %s1973
          %s1975 = sand.u32 %s186, 1
          %s1976 = scalar_lea.vmem [#allocation8], %s1975
          %1978 = dma.done %s1974, 16
        $region80: #{tpu_custom_call.1} parent=75 // pred_fallthru
          _
      $region76: #{tpu_custom_call.1} parent=5 // pred_fallthru
        _
    $region6: #{tpu_custom_call.1} parent=1 // loop_footer
      %s24 = sadd.s32 1, %s20
    $region7: #{tpu_custom_call.1} parent=1 // loop_footer_branch
      %19 = sbr.rel target = $region3
    $region8: #{tpu_custom_call.1} parent=1 // loop_exit
      _
    %1979 = vsyncpa [#allocation3], 1
    %s1980 = scalar_lea.sflag [#allocation3], 1
    %1981 = vsyncpa %s1980, 1
    %1982 = vsyncpa [#allocation6], 1
    %1983 = vsyncpa [#allocation4], 1
    %s1984 = scalar_lea.sflag [#allocation4], 1
    %1985 = vsyncpa %s1984, 1

</llo_original>
